<compile_context>
chip_gen: v7x
topology: tpu7x:2x2x1
jax: 0.10.0
libtpu: 0.0.40
codegen_flags: <defaults>
</compile_context>

<pallas_src>
import functools

import jax
import jax.numpy as jnp
from jax import lax
from jax.experimental import pallas as pl
from jax.experimental.pallas import tpu as pltpu

EPS = 1e-5

# Tap order matches the PyTorch OIHW kernel flattened as (ky, kx).
_TAPS = tuple((ky, kx) for ky in range(3) for kx in range(3))


def _conv3x3(v, w_ref, col, H, W):
    """3x3 same-padding conv on one image via roll-based im2col.

    v:     (Cin, H*W) f32 activations, spatial axis flattened & lane-dense.
    w_ref: (9, Cout, Cin) f32 weight taps ((ky, kx)-major); cast to bf16 at
           the MXU so each tap is a single matmul pass (f32 accumulation).
    col:   (1, H*W) int32 per-pixel column index (tiny, VMEM-resident).
    Returns (Cout, H*W) f32.
    """
    HW = H * W
    cout = w_ref.shape[1]
    pos = lax.broadcasted_iota(jnp.int32, (1, HW), 1)   # flat pixel index
    acc = jnp.zeros((cout, HW), dtype=jnp.float32)
    for t, (ky, kx) in enumerate(_TAPS):
        oy, ox = ky - 1, kx - 1
        # Tap value: tap[p] == v[p + oy*W + ox]; wrapped reads are masked.
        shift = (-(oy * W + ox)) % HW
        tap = pltpu.roll(v, shift, 1) if shift else v
        # Boundary mask (skipped for the all-valid centre tap oy == ox == 0).
        conds = []
        if oy == -1:
            conds.append(pos >= W)                # row - 1 >= 0
        elif oy == 1:
            conds.append(pos < (H - 1) * W)       # row + 1 <  H
        if ox == -1:
            conds.append(col >= 1)                # col - 1 >= 0
        elif ox == 1:
            conds.append(col < W - 1)             # col + 1 <  W
        if conds:
            m = conds[0]
            for c in conds[1:]:
                m = jnp.logical_and(m, c)
            tap = jnp.where(m, tap, 0.0)
        # One bf16 MXU pass per tap, accumulated in f32 registers.
        acc = acc + jnp.dot(w_ref[t].astype(jnp.bfloat16),
                            tap.astype(jnp.bfloat16),
                            preferred_element_type=jnp.float32)
    return acc


def _conv1_stats_kernel(x_ref, w_ref, col_ref, h_ref, s_ref, q_ref, *, H, W):
    """h1 = conv1(x); emit per-image BN1 partial stats (sum, sum-of-squares)."""
    h = _conv3x3(x_ref[0], w_ref, col_ref[...], H, W)
    h_ref[0] = h
    s_ref[0] = jnp.sum(h, axis=1, keepdims=True)
    q_ref[0] = jnp.sum(h * h, axis=1, keepdims=True)


def _bn_relu_conv2_stats_kernel(h1_ref, sc_ref, sh_ref, w_ref, col_ref,
                                h2_ref, s_ref, q_ref, *, H, W):
    """h2 = conv2(relu(bn1(h1))); emit per-image BN2 partial stats."""
    a = jnp.maximum(h1_ref[0] * sc_ref[...] + sh_ref[...], 0.0)
    h2 = _conv3x3(a, w_ref, col_ref[...], H, W)
    h2_ref[0] = h2
    s_ref[0] = jnp.sum(h2, axis=1, keepdims=True)
    q_ref[0] = jnp.sum(h2 * h2, axis=1, keepdims=True)


def _bn_add_relu_kernel(h2_ref, sc_ref, sh_ref, x_ref, o_ref):
    """out = relu(bn2(h2) + x)   (residual_op is None -> identity shortcut)."""
    o_ref[0] = jnp.maximum(
        h2_ref[0] * sc_ref[...] + sh_ref[...] + x_ref[0], 0.0)


def _bn_scale_shift(s, q, gamma, beta, count):
    """Finalize two-pass BN: fold mean/var/affine into per-channel scale/shift."""
    mean = jnp.sum(s, axis=0) / count                                  # (C, 1)
    var = jnp.maximum(jnp.sum(q, axis=0) / count - mean * mean, 0.0)   # clamp
    scale = gamma.reshape(-1, 1) * lax.rsqrt(var + EPS)
    shift = beta.reshape(-1, 1) - mean * scale
    return scale, shift


@jax.jit
def residual_block(x_nchw, w1, g1, b1, w2, g2, b2):
    """x: (N, C, H, W); w*: (Cout, Cin, 3, 3) OIHW; g*/b*: (Cout,)."""
    N, C, H, W = x_nchw.shape
    Cout = w1.shape[0]
    assert Cout == C, "identity residual (residual_op=None) needs Cout == Cin"
    HW = H * W
    count = N * HW

    # Trailing-dim reshape only (no transpose): (N, C, H*W) is already the
    # per-image channel-major, lane-dense layout the kernels want.
    xr = x_nchw.reshape(N, C, HW)
    # OIHW -> (9, Cout, Cin), tap-major in (ky, kx) order (tiny arrays).
    w1t = jnp.transpose(w1.reshape(Cout, C, 9), (2, 0, 1))
    w2t = jnp.transpose(w2.reshape(Cout, Cout, 9), (2, 0, 1))
    # Per-pixel column index: lets the kernel build all boundary masks from
    # compares only (no (9, N*H*W) f32 mask DMA, no in-kernel div/mod).
    col_ids = (jnp.arange(HW, dtype=jnp.int32) % W).reshape(1, HW)

    cparams = pltpu.CompilerParams(
        dimension_semantics=("parallel",),        # images are independent
        vmem_limit_bytes=48 * 1024 * 1024)        # v7x-safe, > default scoped

    def img_spec(ch):           # one image block, lane-dense (1, ch, H*W)
        return pl.BlockSpec((1, ch, HW), lambda n: (n, 0, 0))

    def resident(shape):        # whole small array, constant index_map
        return pl.BlockSpec(shape, lambda n: (0,) * len(shape))

    stat_spec = pl.BlockSpec((1, Cout, 1), lambda n: (n, 0, 0))
    stat_shape = jax.ShapeDtypeStruct((N, Cout, 1), jnp.float32)
    act_shape = jax.ShapeDtypeStruct((N, Cout, HW), jnp.float32)

    # Pass 1: conv1 + BN1 partial stats.
    h1, s1, q1 = pl.pallas_call(
        functools.partial(_conv1_stats_kernel, H=H, W=W),
        grid=(N,),
        in_specs=[img_spec(C), resident((9, Cout, C)), resident((1, HW))],
        out_specs=[img_spec(Cout), stat_spec, stat_spec],
        out_shape=[act_shape, stat_shape, stat_shape],
        compiler_params=cparams,
    )(xr, w1t, col_ids)
    sc1, sh1 = _bn_scale_shift(s1, q1, g1, b1, count)

    # Pass 2: BN1 + ReLU + conv2 + BN2 partial stats.
    h2, s2, q2 = pl.pallas_call(
        functools.partial(_bn_relu_conv2_stats_kernel, H=H, W=W),
        grid=(N,),
        in_specs=[img_spec(Cout), resident((Cout, 1)), resident((Cout, 1)),
                  resident((9, Cout, Cout)), resident((1, HW))],
        out_specs=[img_spec(Cout), stat_spec, stat_spec],
        out_shape=[act_shape, stat_shape, stat_shape],
        compiler_params=cparams,
    )(h1, sc1, sh1, w2t, col_ids)
    sc2, sh2 = _bn_scale_shift(s2, q2, g2, b2, count)

    # Pass 3: BN2 + identity residual + ReLU.
    out = pl.pallas_call(
        _bn_add_relu_kernel,
        grid=(N,),
        in_specs=[img_spec(Cout), resident((Cout, 1)), resident((Cout, 1)),
                  img_spec(C)],
        out_specs=img_spec(Cout),
        out_shape=jax.ShapeDtypeStruct((N, Cout, HW), x_nchw.dtype),
        compiler_params=cparams,
    )(h2, sc2, sh2, xr)

    return out.reshape(N, Cout, H, W)


def residual_block_reference(x, w1, g1, b1, w2, g2, b2):
    """Pure-JAX reference mirroring the PyTorch forward (training-mode BN)."""
    def conv(v, w):
        return lax.conv_general_dilated(
            v, w, window_strides=(1, 1), padding=((1, 1), (1, 1)),
            dimension_numbers=("NCHW", "OIHW", "NCHW"),
            precision=lax.Precision.HIGHEST)

    def bn(h, g, b):
        mean = jnp.mean(h, axis=(0, 2, 3), keepdims=True)
        var = jnp.mean((h - mean) ** 2, axis=(0, 2, 3), keepdims=True)
        return ((h - mean) * lax.rsqrt(var + EPS) * g.reshape(1, -1, 1, 1)
                + b.reshape(1, -1, 1, 1))

    out = jax.nn.relu(bn(conv(x, w1), g1, b1))
    out = bn(conv(out, w2), g2, b2)
    return jax.nn.relu(out + x)


if __name__ == "__main__":
    N, C, H, W = 2, 4, 16, 16   # residual_op=None, stride=1 => Cout == Cin
    Cout = C

    key = jax.random.PRNGKey(0)
    k1, k2, k3, k4, k5, k6, k7 = jax.random.split(key, 7)

    x = jax.random.normal(k1, (N, C, H, W), dtype=jnp.float32)
    w1 = 0.1 * jax.random.normal(k2, (Cout, C, 3, 3), dtype=jnp.float32)
    w2 = 0.1 * jax.random.normal(k3, (Cout, Cout, 3, 3), dtype=jnp.float32)
    g1 = 1.0 + 0.1 * jax.random.normal(k4, (Cout,), dtype=jnp.float32)
    b1 = 0.1 * jax.random.normal(k5, (Cout,), dtype=jnp.float32)
    g2 = 1.0 + 0.1 * jax.random.normal(k6, (Cout,), dtype=jnp.float32)
    b2 = 0.1 * jax.random.normal(k7, (Cout,), dtype=jnp.float32)

    out = jax.block_until_ready(residual_block(x, w1, g1, b1, w2, g2, b2))
    ref = jax.block_until_ready(
        residual_block_reference(x, w1, g1, b1, w2, g2, b2))
    assert out.shape == ref.shape == (N, C, H, W)
    # Tolerance sized for single-pass bf16 MXU convs (f32 accumulation)
    # followed by two batch-norm renormalizations; a wrong tap/mask/BN bug
    # would show up as O(0.1-1) errors.
    err = float(jnp.max(jnp.abs(out - ref)))
    assert err < 3e-2, f"max abs err = {err}"

    print("KERNEL_OK")
</pallas_src>

<mosaic_0001>
module attributes {stable_mosaic.version = 11 : i64} {
  func.func @_conv1_stats_kernel(%arg0: i32, %arg1: memref<1x4x256xf32, #tpu.memory_space<vmem>>, %arg2: memref<9x4x4xf32, #tpu.memory_space<vmem>>, %arg3: memref<1x256xi32, #tpu.memory_space<vmem>>, %arg4: memref<1x4x256xf32, #tpu.memory_space<vmem>>, %arg5: memref<1x4x1xf32, #tpu.memory_space<vmem>>, %arg6: memref<1x4x1xf32, #tpu.memory_space<vmem>>) attributes {dimension_semantics = [#tpu.dimension_semantics<parallel>], iteration_bounds = array<i64: 2>, scalar_prefetch = 0 : i64, scratch_operands = 0 : i64, tpu.core_type = #tpu.core_type<tc>, window_params = [{transform_indices = @transform_0, window_bounds = array<i64: 1, 4, 256>}, {pipeline_mode = #tpu.pipeline_mode<synchronous>, transform_indices = @transform_1, window_bounds = array<i64: 9, 4, 4>}, {pipeline_mode = #tpu.pipeline_mode<synchronous>, transform_indices = @transform_2, window_bounds = array<i64: 1, 256>}, {transform_indices = @transform_3, window_bounds = array<i64: 1, 4, 256>}, {transform_indices = @transform_4, window_bounds = array<i64: 1, 4, 1>}, {transform_indices = @transform_5, window_bounds = array<i64: 1, 4, 1>}]} {
    %c0 = arith.constant 0 : index
    %c0_0 = arith.constant 0 : index
    %c0_1 = arith.constant 0 : index
    %0 = vector.load %arg1[%c0, %c0_0, %c0_1] : memref<1x4x256xf32, #tpu.memory_space<vmem>>, vector<1x4x256xf32>
    %1 = vector.shape_cast %0 : vector<1x4x256xf32> to vector<4x256xf32>
    %c0_2 = arith.constant 0 : index
    %c0_3 = arith.constant 0 : index
    %2 = vector.load %arg3[%c0_2, %c0_3] : memref<1x256xi32, #tpu.memory_space<vmem>>, vector<1x256xi32>
    %3 = tpu.iota {dimensions = array<i32: 1>} : vector<1x256xi32>
    %cst = arith.constant 0.000000e+00 : f32
    %4 = vector.broadcast %cst : f32 to vector<4x256xf32>
    %c17_i32 = arith.constant 17 : i32
    %5 = tpu.dynamic_rotate %1 by %c17_i32 dim 1 : vector<4x256xf32>, i32 -> vector<4x256xf32>
    %c16_i32 = arith.constant 16 : i32
    %6 = vector.broadcast %c16_i32 : i32 to vector<1x256xi32>
    %7 = arith.cmpi sge, %3, %6 : vector<1x256xi32>
    %c1_i32 = arith.constant 1 : i32
    %8 = vector.broadcast %c1_i32 : i32 to vector<1x256xi32>
    %9 = arith.cmpi sge, %2, %8 : vector<1x256xi32>
    %10 = arith.andi %7, %9 : vector<1x256xi1>
    %cst_4 = arith.constant 0.000000e+00 : f32
    %11 = vector.shape_cast %10 : vector<1x256xi1> to vector<1x256xi1>
    %12 = vector.broadcast %11 : vector<1x256xi1> to vector<4x256xi1>
    %13 = vector.broadcast %cst_4 : f32 to vector<4x256xf32>
    %14 = arith.select %12, %5, %13 : vector<4x256xi1>, vector<4x256xf32>
    %c0_5 = arith.constant 0 : index
    %c0_6 = arith.constant 0 : index
    %c0_7 = arith.constant 0 : index
    %15 = vector.load %arg2[%c0_5, %c0_6, %c0_7] : memref<9x4x4xf32, #tpu.memory_space<vmem>>, vector<1x4x4xf32>
    %16 = vector.shape_cast %15 : vector<1x4x4xf32> to vector<4x4xf32>
    %17 = arith.truncf %16 : vector<4x4xf32> to vector<4x4xbf16>
    %18 = arith.truncf %14 : vector<4x256xf32> to vector<4x256xbf16>
    %cst_8 = arith.constant dense<0.000000e+00> : vector<4x256xf32>
    %19 = tpu.matmul %17, %18, %cst_8 {dimension_numbers = #tpu.dot_dimension_numbers<[1], [0], [0], [1], [0, 0, 1, 1], [], []>} : vector<4x4xbf16>, vector<4x256xbf16>, vector<4x256xf32> -> vector<4x256xf32>
    %20 = arith.addf %4, %19 : vector<4x256xf32>
    %c16_i32_9 = arith.constant 16 : i32
    %21 = tpu.dynamic_rotate %1 by %c16_i32_9 dim 1 : vector<4x256xf32>, i32 -> vector<4x256xf32>
    %c16_i32_10 = arith.constant 16 : i32
    %22 = vector.broadcast %c16_i32_10 : i32 to vector<1x256xi32>
    %23 = arith.cmpi sge, %3, %22 : vector<1x256xi32>
    %cst_11 = arith.constant 0.000000e+00 : f32
    %24 = vector.shape_cast %23 : vector<1x256xi1> to vector<1x256xi1>
    %25 = vector.broadcast %24 : vector<1x256xi1> to vector<4x256xi1>
    %26 = vector.broadcast %cst_11 : f32 to vector<4x256xf32>
    %27 = arith.select %25, %21, %26 : vector<4x256xi1>, vector<4x256xf32>
    %c1 = arith.constant 1 : index
    %c0_12 = arith.constant 0 : index
    %c0_13 = arith.constant 0 : index
    %28 = vector.load %arg2[%c1, %c0_12, %c0_13] : memref<9x4x4xf32, #tpu.memory_space<vmem>>, vector<1x4x4xf32>
    %29 = vector.shape_cast %28 : vector<1x4x4xf32> to vector<4x4xf32>
    %30 = arith.truncf %29 : vector<4x4xf32> to vector<4x4xbf16>
    %31 = arith.truncf %27 : vector<4x256xf32> to vector<4x256xbf16>
    %cst_14 = arith.constant dense<0.000000e+00> : vector<4x256xf32>
    %32 = tpu.matmul %30, %31, %cst_14 {dimension_numbers = #tpu.dot_dimension_numbers<[1], [0], [0], [1], [0, 0, 1, 1], [], []>} : vector<4x4xbf16>, vector<4x256xbf16>, vector<4x256xf32> -> vector<4x256xf32>
    %33 = arith.addf %20, %32 : vector<4x256xf32>
    %c15_i32 = arith.constant 15 : i32
    %34 = tpu.dynamic_rotate %1 by %c15_i32 dim 1 : vector<4x256xf32>, i32 -> vector<4x256xf32>
    %c16_i32_15 = arith.constant 16 : i32
    %35 = vector.broadcast %c16_i32_15 : i32 to vector<1x256xi32>
    %36 = arith.cmpi sge, %3, %35 : vector<1x256xi32>
    %c15_i32_16 = arith.constant 15 : i32
    %37 = vector.broadcast %c15_i32_16 : i32 to vector<1x256xi32>
    %38 = arith.cmpi slt, %2, %37 : vector<1x256xi32>
    %39 = arith.andi %36, %38 : vector<1x256xi1>
    %cst_17 = arith.constant 0.000000e+00 : f32
    %40 = vector.shape_cast %39 : vector<1x256xi1> to vector<1x256xi1>
    %41 = vector.broadcast %40 : vector<1x256xi1> to vector<4x256xi1>
    %42 = vector.broadcast %cst_17 : f32 to vector<4x256xf32>
    %43 = arith.select %41, %34, %42 : vector<4x256xi1>, vector<4x256xf32>
    %c2 = arith.constant 2 : index
    %c0_18 = arith.constant 0 : index
    %c0_19 = arith.constant 0 : index
    %44 = vector.load %arg2[%c2, %c0_18, %c0_19] : memref<9x4x4xf32, #tpu.memory_space<vmem>>, vector<1x4x4xf32>
    %45 = vector.shape_cast %44 : vector<1x4x4xf32> to vector<4x4xf32>
    %46 = arith.truncf %45 : vector<4x4xf32> to vector<4x4xbf16>
    %47 = arith.truncf %43 : vector<4x256xf32> to vector<4x256xbf16>
    %cst_20 = arith.constant dense<0.000000e+00> : vector<4x256xf32>
    %48 = tpu.matmul %46, %47, %cst_20 {dimension_numbers = #tpu.dot_dimension_numbers<[1], [0], [0], [1], [0, 0, 1, 1], [], []>} : vector<4x4xbf16>, vector<4x256xbf16>, vector<4x256xf32> -> vector<4x256xf32>
    %49 = arith.addf %33, %48 : vector<4x256xf32>
    %c1_i32_21 = arith.constant 1 : i32
    %50 = tpu.dynamic_rotate %1 by %c1_i32_21 dim 1 : vector<4x256xf32>, i32 -> vector<4x256xf32>
    %c1_i32_22 = arith.constant 1 : i32
    %51 = vector.broadcast %c1_i32_22 : i32 to vector<1x256xi32>
    %52 = arith.cmpi sge, %2, %51 : vector<1x256xi32>
    %cst_23 = arith.constant 0.000000e+00 : f32
    %53 = vector.shape_cast %52 : vector<1x256xi1> to vector<1x256xi1>
    %54 = vector.broadcast %53 : vector<1x256xi1> to vector<4x256xi1>
    %55 = vector.broadcast %cst_23 : f32 to vector<4x256xf32>
    %56 = arith.select %54, %50, %55 : vector<4x256xi1>, vector<4x256xf32>
    %c3 = arith.constant 3 : index
    %c0_24 = arith.constant 0 : index
    %c0_25 = arith.constant 0 : index
    %57 = vector.load %arg2[%c3, %c0_24, %c0_25] : memref<9x4x4xf32, #tpu.memory_space<vmem>>, vector<1x4x4xf32>
    %58 = vector.shape_cast %57 : vector<1x4x4xf32> to vector<4x4xf32>
    %59 = arith.truncf %58 : vector<4x4xf32> to vector<4x4xbf16>
    %60 = arith.truncf %56 : vector<4x256xf32> to vector<4x256xbf16>
    %cst_26 = arith.constant dense<0.000000e+00> : vector<4x256xf32>
    %61 = tpu.matmul %59, %60, %cst_26 {dimension_numbers = #tpu.dot_dimension_numbers<[1], [0], [0], [1], [0, 0, 1, 1], [], []>} : vector<4x4xbf16>, vector<4x256xbf16>, vector<4x256xf32> -> vector<4x256xf32>
    %62 = arith.addf %49, %61 : vector<4x256xf32>
    %c4 = arith.constant 4 : index
    %c0_27 = arith.constant 0 : index
    %c0_28 = arith.constant 0 : index
    %63 = vector.load %arg2[%c4, %c0_27, %c0_28] : memref<9x4x4xf32, #tpu.memory_space<vmem>>, vector<1x4x4xf32>
    %64 = vector.shape_cast %63 : vector<1x4x4xf32> to vector<4x4xf32>
    %65 = arith.truncf %64 : vector<4x4xf32> to vector<4x4xbf16>
    %66 = arith.truncf %1 : vector<4x256xf32> to vector<4x256xbf16>
    %cst_29 = arith.constant dense<0.000000e+00> : vector<4x256xf32>
    %67 = tpu.matmul %65, %66, %cst_29 {dimension_numbers = #tpu.dot_dimension_numbers<[1], [0], [0], [1], [0, 0, 1, 1], [], []>} : vector<4x4xbf16>, vector<4x256xbf16>, vector<4x256xf32> -> vector<4x256xf32>
    %68 = arith.addf %62, %67 : vector<4x256xf32>
    %c255_i32 = arith.constant 255 : i32
    %69 = tpu.dynamic_rotate %1 by %c255_i32 dim 1 : vector<4x256xf32>, i32 -> vector<4x256xf32>
    %c15_i32_30 = arith.constant 15 : i32
    %70 = vector.broadcast %c15_i32_30 : i32 to vector<1x256xi32>
    %71 = arith.cmpi slt, %2, %70 : vector<1x256xi32>
    %cst_31 = arith.constant 0.000000e+00 : f32
    %72 = vector.shape_cast %71 : vector<1x256xi1> to vector<1x256xi1>
    %73 = vector.broadcast %72 : vector<1x256xi1> to vector<4x256xi1>
    %74 = vector.broadcast %cst_31 : f32 to vector<4x256xf32>
    %75 = arith.select %73, %69, %74 : vector<4x256xi1>, vector<4x256xf32>
    %c5 = arith.constant 5 : index
    %c0_32 = arith.constant 0 : index
    %c0_33 = arith.constant 0 : index
    %76 = vector.load %arg2[%c5, %c0_32, %c0_33] : memref<9x4x4xf32, #tpu.memory_space<vmem>>, vector<1x4x4xf32>
    %77 = vector.shape_cast %76 : vector<1x4x4xf32> to vector<4x4xf32>
    %78 = arith.truncf %77 : vector<4x4xf32> to vector<4x4xbf16>
    %79 = arith.truncf %75 : vector<4x256xf32> to vector<4x256xbf16>
    %cst_34 = arith.constant dense<0.000000e+00> : vector<4x256xf32>
    %80 = tpu.matmul %78, %79, %cst_34 {dimension_numbers = #tpu.dot_dimension_numbers<[1], [0], [0], [1], [0, 0, 1, 1], [], []>} : vector<4x4xbf16>, vector<4x256xbf16>, vector<4x256xf32> -> vector<4x256xf32>
    %81 = arith.addf %68, %80 : vector<4x256xf32>
    %c241_i32 = arith.constant 241 : i32
    %82 = tpu.dynamic_rotate %1 by %c241_i32 dim 1 : vector<4x256xf32>, i32 -> vector<4x256xf32>
    %c240_i32 = arith.constant 240 : i32
    %83 = vector.broadcast %c240_i32 : i32 to vector<1x256xi32>
    %84 = arith.cmpi slt, %3, %83 : vector<1x256xi32>
    %c1_i32_35 = arith.constant 1 : i32
    %85 = vector.broadcast %c1_i32_35 : i32 to vector<1x256xi32>
    %86 = arith.cmpi sge, %2, %85 : vector<1x256xi32>
    %87 = arith.andi %84, %86 : vector<1x256xi1>
    %cst_36 = arith.constant 0.000000e+00 : f32
    %88 = vector.shape_cast %87 : vector<1x256xi1> to vector<1x256xi1>
    %89 = vector.broadcast %88 : vector<1x256xi1> to vector<4x256xi1>
    %90 = vector.broadcast %cst_36 : f32 to vector<4x256xf32>
    %91 = arith.select %89, %82, %90 : vector<4x256xi1>, vector<4x256xf32>
    %c6 = arith.constant 6 : index
    %c0_37 = arith.constant 0 : index
    %c0_38 = arith.constant 0 : index
    %92 = vector.load %arg2[%c6, %c0_37, %c0_38] : memref<9x4x4xf32, #tpu.memory_space<vmem>>, vector<1x4x4xf32>
    %93 = vector.shape_cast %92 : vector<1x4x4xf32> to vector<4x4xf32>
    %94 = arith.truncf %93 : vector<4x4xf32> to vector<4x4xbf16>
    %95 = arith.truncf %91 : vector<4x256xf32> to vector<4x256xbf16>
    %cst_39 = arith.constant dense<0.000000e+00> : vector<4x256xf32>
    %96 = tpu.matmul %94, %95, %cst_39 {dimension_numbers = #tpu.dot_dimension_numbers<[1], [0], [0], [1], [0, 0, 1, 1], [], []>} : vector<4x4xbf16>, vector<4x256xbf16>, vector<4x256xf32> -> vector<4x256xf32>
    %97 = arith.addf %81, %96 : vector<4x256xf32>
    %c240_i32_40 = arith.constant 240 : i32
    %98 = tpu.dynamic_rotate %1 by %c240_i32_40 dim 1 : vector<4x256xf32>, i32 -> vector<4x256xf32>
    %c240_i32_41 = arith.constant 240 : i32
    %99 = vector.broadcast %c240_i32_41 : i32 to vector<1x256xi32>
    %100 = arith.cmpi slt, %3, %99 : vector<1x256xi32>
    %cst_42 = arith.constant 0.000000e+00 : f32
    %101 = vector.shape_cast %100 : vector<1x256xi1> to vector<1x256xi1>
    %102 = vector.broadcast %101 : vector<1x256xi1> to vector<4x256xi1>
    %103 = vector.broadcast %cst_42 : f32 to vector<4x256xf32>
    %104 = arith.select %102, %98, %103 : vector<4x256xi1>, vector<4x256xf32>
    %c7 = arith.constant 7 : index
    %c0_43 = arith.constant 0 : index
    %c0_44 = arith.constant 0 : index
    %105 = vector.load %arg2[%c7, %c0_43, %c0_44] : memref<9x4x4xf32, #tpu.memory_space<vmem>>, vector<1x4x4xf32>
    %106 = vector.shape_cast %105 : vector<1x4x4xf32> to vector<4x4xf32>
    %107 = arith.truncf %106 : vector<4x4xf32> to vector<4x4xbf16>
    %108 = arith.truncf %104 : vector<4x256xf32> to vector<4x256xbf16>
    %cst_45 = arith.constant dense<0.000000e+00> : vector<4x256xf32>
    %109 = tpu.matmul %107, %108, %cst_45 {dimension_numbers = #tpu.dot_dimension_numbers<[1], [0], [0], [1], [0, 0, 1, 1], [], []>} : vector<4x4xbf16>, vector<4x256xbf16>, vector<4x256xf32> -> vector<4x256xf32>
    %110 = arith.addf %97, %109 : vector<4x256xf32>
    %c239_i32 = arith.constant 239 : i32
    %111 = tpu.dynamic_rotate %1 by %c239_i32 dim 1 : vector<4x256xf32>, i32 -> vector<4x256xf32>
    %c240_i32_46 = arith.constant 240 : i32
    %112 = vector.broadcast %c240_i32_46 : i32 to vector<1x256xi32>
    %113 = arith.cmpi slt, %3, %112 : vector<1x256xi32>
    %c15_i32_47 = arith.constant 15 : i32
    %114 = vector.broadcast %c15_i32_47 : i32 to vector<1x256xi32>
    %115 = arith.cmpi slt, %2, %114 : vector<1x256xi32>
    %116 = arith.andi %113, %115 : vector<1x256xi1>
    %cst_48 = arith.constant 0.000000e+00 : f32
    %117 = vector.shape_cast %116 : vector<1x256xi1> to vector<1x256xi1>
    %118 = vector.broadcast %117 : vector<1x256xi1> to vector<4x256xi1>
    %119 = vector.broadcast %cst_48 : f32 to vector<4x256xf32>
    %120 = arith.select %118, %111, %119 : vector<4x256xi1>, vector<4x256xf32>
    %c8 = arith.constant 8 : index
    %c0_49 = arith.constant 0 : index
    %c0_50 = arith.constant 0 : index
    %121 = vector.load %arg2[%c8, %c0_49, %c0_50] : memref<9x4x4xf32, #tpu.memory_space<vmem>>, vector<1x4x4xf32>
    %122 = vector.shape_cast %121 : vector<1x4x4xf32> to vector<4x4xf32>
    %123 = arith.truncf %122 : vector<4x4xf32> to vector<4x4xbf16>
    %124 = arith.truncf %120 : vector<4x256xf32> to vector<4x256xbf16>
    %cst_51 = arith.constant dense<0.000000e+00> : vector<4x256xf32>
    %125 = tpu.matmul %123, %124, %cst_51 {dimension_numbers = #tpu.dot_dimension_numbers<[1], [0], [0], [1], [0, 0, 1, 1], [], []>} : vector<4x4xbf16>, vector<4x256xbf16>, vector<4x256xf32> -> vector<4x256xf32>
    %126 = arith.addf %110, %125 : vector<4x256xf32>
    %c0_52 = arith.constant 0 : index
    %c0_53 = arith.constant 0 : index
    %c0_54 = arith.constant 0 : index
    %127 = vector.load %arg4[%c0_52, %c0_53, %c0_54] : memref<1x4x256xf32, #tpu.memory_space<vmem>>, vector<1x4x256xf32>
    %128 = vector.shape_cast %127 : vector<1x4x256xf32> to vector<4x256xf32>
    %129 = vector.shape_cast %126 : vector<4x256xf32> to vector<1x4x256xf32>
    tpu.vector_store %arg4[%c0_52, %c0_53, %c0_54], %129 {strides = array<i32>} : memref<1x4x256xf32, #tpu.memory_space<vmem>>, vector<1x4x256xf32>,
    %cst_55 = arith.constant dense<0.000000e+00> : vector<4xf32>
    %130 = vector.multi_reduction <add>, %126, %cst_55 [1] : vector<4x256xf32> to vector<4xf32>
    %131 = vector.shape_cast %130 : vector<4xf32> to vector<4x1xf32>
    %c0_56 = arith.constant 0 : index
    %c0_57 = arith.constant 0 : index
    %c0_58 = arith.constant 0 : index
    %132 = vector.load %arg5[%c0_56, %c0_57, %c0_58] : memref<1x4x1xf32, #tpu.memory_space<vmem>>, vector<1x4x1xf32>
    %133 = vector.shape_cast %132 : vector<1x4x1xf32> to vector<4x1xf32>
    %134 = vector.shape_cast %131 : vector<4x1xf32> to vector<1x4x1xf32>
    tpu.vector_store %arg5[%c0_56, %c0_57, %c0_58], %134 {strides = array<i32>} : memref<1x4x1xf32, #tpu.memory_space<vmem>>, vector<1x4x1xf32>,
    %135 = arith.mulf %126, %126 : vector<4x256xf32>
    %cst_59 = arith.constant dense<0.000000e+00> : vector<4xf32>
    %136 = vector.multi_reduction <add>, %135, %cst_59 [1] : vector<4x256xf32> to vector<4xf32>
    %137 = vector.shape_cast %136 : vector<4xf32> to vector<4x1xf32>
    %c0_60 = arith.constant 0 : index
    %c0_61 = arith.constant 0 : index
    %c0_62 = arith.constant 0 : index
    %138 = vector.load %arg6[%c0_60, %c0_61, %c0_62] : memref<1x4x1xf32, #tpu.memory_space<vmem>>, vector<1x4x1xf32>
    %139 = vector.shape_cast %138 : vector<1x4x1xf32> to vector<4x1xf32>
    %140 = vector.shape_cast %137 : vector<4x1xf32> to vector<1x4x1xf32>
    tpu.vector_store %arg6[%c0_60, %c0_61, %c0_62], %140 {strides = array<i32>} : memref<1x4x1xf32, #tpu.memory_space<vmem>>, vector<1x4x1xf32>,
    return
  }
  func.func @transform_0(%arg0: i32) -> (i32, i32, i32) {
    %c0_i32 = arith.constant 0 : i32
    %c0_i32_0 = arith.constant 0 : i32
    %c0_i32_1 = arith.constant 0 : i32
    return %arg0, %c0_i32, %c0_i32_0 : i32, i32, i32
  }
  func.func @transform_1(%arg0: i32) -> (i32, i32, i32) {
    %c0_i32 = arith.constant 0 : i32
    %c0_i32_0 = arith.constant 0 : i32
    %c0_i32_1 = arith.constant 0 : i32
    %c0_i32_2 = arith.constant 0 : i32
    return %c0_i32, %c0_i32_0, %c0_i32_1 : i32, i32, i32
  }
  func.func @transform_2(%arg0: i32) -> (i32, i32) {
    %c0_i32 = arith.constant 0 : i32
    %c0_i32_0 = arith.constant 0 : i32
    %c0_i32_1 = arith.constant 0 : i32
    return %c0_i32, %c0_i32_0 : i32, i32
  }
  func.func @transform_3(%arg0: i32) -> (i32, i32, i32) {
    %c0_i32 = arith.constant 0 : i32
    %c0_i32_0 = arith.constant 0 : i32
    %c0_i32_1 = arith.constant 0 : i32
    return %arg0, %c0_i32, %c0_i32_0 : i32, i32, i32
  }
  func.func @transform_4(%arg0: i32) -> (i32, i32, i32) {
    %c0_i32 = arith.constant 0 : i32
    %c0_i32_0 = arith.constant 0 : i32
    %c0_i32_1 = arith.constant 0 : i32
    return %arg0, %c0_i32, %c0_i32_0 : i32, i32, i32
  }
  func.func @transform_5(%arg0: i32) -> (i32, i32, i32) {
    %c0_i32 = arith.constant 0 : i32
    %c0_i32_0 = arith.constant 0 : i32
    %c0_i32_1 = arith.constant 0 : i32
    return %arg0, %c0_i32, %c0_i32_0 : i32, i32, i32
  }
}

module attributes {stable_mosaic.version = 11 : i64} {
  func.func @_bn_relu_conv2_stats_kernel(%arg0: i32, %arg1: memref<1x4x256xf32, #tpu.memory_space<vmem>>, %arg2: memref<4x1xf32, #tpu.memory_space<vmem>>, %arg3: memref<4x1xf32, #tpu.memory_space<vmem>>, %arg4: memref<9x4x4xf32, #tpu.memory_space<vmem>>, %arg5: memref<1x256xi32, #tpu.memory_space<vmem>>, %arg6: memref<1x4x256xf32, #tpu.memory_space<vmem>>, %arg7: memref<1x4x1xf32, #tpu.memory_space<vmem>>, %arg8: memref<1x4x1xf32, #tpu.memory_space<vmem>>) attributes {dimension_semantics = [#tpu.dimension_semantics<parallel>], iteration_bounds = array<i64: 2>, scalar_prefetch = 0 : i64, scratch_operands = 0 : i64, tpu.core_type = #tpu.core_type<tc>, window_params = [{transform_indices = @transform_0, window_bounds = array<i64: 1, 4, 256>}, {pipeline_mode = #tpu.pipeline_mode<synchronous>, transform_indices = @transform_1, window_bounds = array<i64: 4, 1>}, {pipeline_mode = #tpu.pipeline_mode<synchronous>, transform_indices = @transform_2, window_bounds = array<i64: 4, 1>}, {pipeline_mode = #tpu.pipeline_mode<synchronous>, transform_indices = @transform_3, window_bounds = array<i64: 9, 4, 4>}, {pipeline_mode = #tpu.pipeline_mode<synchronous>, transform_indices = @transform_4, window_bounds = array<i64: 1, 256>}, {transform_indices = @transform_5, window_bounds = array<i64: 1, 4, 256>}, {transform_indices = @transform_6, window_bounds = array<i64: 1, 4, 1>}, {transform_indices = @transform_7, window_bounds = array<i64: 1, 4, 1>}]} {
    %c0 = arith.constant 0 : index
    %c0_0 = arith.constant 0 : index
    %c0_1 = arith.constant 0 : index
    %0 = vector.load %arg1[%c0, %c0_0, %c0_1] : memref<1x4x256xf32, #tpu.memory_space<vmem>>, vector<1x4x256xf32>
    %1 = vector.shape_cast %0 : vector<1x4x256xf32> to vector<4x256xf32>
    %c0_2 = arith.constant 0 : index
    %c0_3 = arith.constant 0 : index
    %2 = vector.load %arg2[%c0_2, %c0_3] : memref<4x1xf32, #tpu.memory_space<vmem>>, vector<4x1xf32>
    %3 = vector.broadcast %2 : vector<4x1xf32> to vector<4x256xf32>
    %4 = arith.mulf %1, %3 : vector<4x256xf32>
    %c0_4 = arith.constant 0 : index
    %c0_5 = arith.constant 0 : index
    %5 = vector.load %arg3[%c0_4, %c0_5] : memref<4x1xf32, #tpu.memory_space<vmem>>, vector<4x1xf32>
    %6 = vector.broadcast %5 : vector<4x1xf32> to vector<4x256xf32>
    %7 = arith.addf %4, %6 : vector<4x256xf32>
    %cst = arith.constant 0.000000e+00 : f32
    %8 = vector.broadcast %cst : f32 to vector<4x256xf32>
    %9 = arith.maximumf %7, %8 : vector<4x256xf32>
    %c0_6 = arith.constant 0 : index
    %c0_7 = arith.constant 0 : index
    %10 = vector.load %arg5[%c0_6, %c0_7] : memref<1x256xi32, #tpu.memory_space<vmem>>, vector<1x256xi32>
    %11 = tpu.iota {dimensions = array<i32: 1>} : vector<1x256xi32>
    %cst_8 = arith.constant 0.000000e+00 : f32
    %12 = vector.broadcast %cst_8 : f32 to vector<4x256xf32>
    %c17_i32 = arith.constant 17 : i32
    %13 = tpu.dynamic_rotate %9 by %c17_i32 dim 1 : vector<4x256xf32>, i32 -> vector<4x256xf32>
    %c16_i32 = arith.constant 16 : i32
    %14 = vector.broadcast %c16_i32 : i32 to vector<1x256xi32>
    %15 = arith.cmpi sge, %11, %14 : vector<1x256xi32>
    %c1_i32 = arith.constant 1 : i32
    %16 = vector.broadcast %c1_i32 : i32 to vector<1x256xi32>
    %17 = arith.cmpi sge, %10, %16 : vector<1x256xi32>
    %18 = arith.andi %15, %17 : vector<1x256xi1>
    %cst_9 = arith.constant 0.000000e+00 : f32
    %19 = vector.shape_cast %18 : vector<1x256xi1> to vector<1x256xi1>
    %20 = vector.broadcast %19 : vector<1x256xi1> to vector<4x256xi1>
    %21 = vector.broadcast %cst_9 : f32 to vector<4x256xf32>
    %22 = arith.select %20, %13, %21 : vector<4x256xi1>, vector<4x256xf32>
    %c0_10 = arith.constant 0 : index
    %c0_11 = arith.constant 0 : index
    %c0_12 = arith.constant 0 : index
    %23 = vector.load %arg4[%c0_10, %c0_11, %c0_12] : memref<9x4x4xf32, #tpu.memory_space<vmem>>, vector<1x4x4xf32>
    %24 = vector.shape_cast %23 : vector<1x4x4xf32> to vector<4x4xf32>
    %25 = arith.truncf %24 : vector<4x4xf32> to vector<4x4xbf16>
    %26 = arith.truncf %22 : vector<4x256xf32> to vector<4x256xbf16>
    %cst_13 = arith.constant dense<0.000000e+00> : vector<4x256xf32>
    %27 = tpu.matmul %25, %26, %cst_13 {dimension_numbers = #tpu.dot_dimension_numbers<[1], [0], [0], [1], [0, 0, 1, 1], [], []>} : vector<4x4xbf16>, vector<4x256xbf16>, vector<4x256xf32> -> vector<4x256xf32>
    %28 = arith.addf %12, %27 : vector<4x256xf32>
    %c16_i32_14 = arith.constant 16 : i32
    %29 = tpu.dynamic_rotate %9 by %c16_i32_14 dim 1 : vector<4x256xf32>, i32 -> vector<4x256xf32>
    %c16_i32_15 = arith.constant 16 : i32
    %30 = vector.broadcast %c16_i32_15 : i32 to vector<1x256xi32>
    %31 = arith.cmpi sge, %11, %30 : vector<1x256xi32>
    %cst_16 = arith.constant 0.000000e+00 : f32
    %32 = vector.shape_cast %31 : vector<1x256xi1> to vector<1x256xi1>
    %33 = vector.broadcast %32 : vector<1x256xi1> to vector<4x256xi1>
    %34 = vector.broadcast %cst_16 : f32 to vector<4x256xf32>
    %35 = arith.select %33, %29, %34 : vector<4x256xi1>, vector<4x256xf32>
    %c1 = arith.constant 1 : index
    %c0_17 = arith.constant 0 : index
    %c0_18 = arith.constant 0 : index
    %36 = vector.load %arg4[%c1, %c0_17, %c0_18] : memref<9x4x4xf32, #tpu.memory_space<vmem>>, vector<1x4x4xf32>
    %37 = vector.shape_cast %36 : vector<1x4x4xf32> to vector<4x4xf32>
    %38 = arith.truncf %37 : vector<4x4xf32> to vector<4x4xbf16>
    %39 = arith.truncf %35 : vector<4x256xf32> to vector<4x256xbf16>
    %cst_19 = arith.constant dense<0.000000e+00> : vector<4x256xf32>
    %40 = tpu.matmul %38, %39, %cst_19 {dimension_numbers = #tpu.dot_dimension_numbers<[1], [0], [0], [1], [0, 0, 1, 1], [], []>} : vector<4x4xbf16>, vector<4x256xbf16>, vector<4x256xf32> -> vector<4x256xf32>
    %41 = arith.addf %28, %40 : vector<4x256xf32>
    %c15_i32 = arith.constant 15 : i32
    %42 = tpu.dynamic_rotate %9 by %c15_i32 dim 1 : vector<4x256xf32>, i32 -> vector<4x256xf32>
    %c16_i32_20 = arith.constant 16 : i32
    %43 = vector.broadcast %c16_i32_20 : i32 to vector<1x256xi32>
    %44 = arith.cmpi sge, %11, %43 : vector<1x256xi32>
    %c15_i32_21 = arith.constant 15 : i32
    %45 = vector.broadcast %c15_i32_21 : i32 to vector<1x256xi32>
    %46 = arith.cmpi slt, %10, %45 : vector<1x256xi32>
    %47 = arith.andi %44, %46 : vector<1x256xi1>
    %cst_22 = arith.constant 0.000000e+00 : f32
    %48 = vector.shape_cast %47 : vector<1x256xi1> to vector<1x256xi1>
    %49 = vector.broadcast %48 : vector<1x256xi1> to vector<4x256xi1>
    %50 = vector.broadcast %cst_22 : f32 to vector<4x256xf32>
    %51 = arith.select %49, %42, %50 : vector<4x256xi1>, vector<4x256xf32>
    %c2 = arith.constant 2 : index
    %c0_23 = arith.constant 0 : index
    %c0_24 = arith.constant 0 : index
    %52 = vector.load %arg4[%c2, %c0_23, %c0_24] : memref<9x4x4xf32, #tpu.memory_space<vmem>>, vector<1x4x4xf32>
    %53 = vector.shape_cast %52 : vector<1x4x4xf32> to vector<4x4xf32>
    %54 = arith.truncf %53 : vector<4x4xf32> to vector<4x4xbf16>
    %55 = arith.truncf %51 : vector<4x256xf32> to vector<4x256xbf16>
    %cst_25 = arith.constant dense<0.000000e+00> : vector<4x256xf32>
    %56 = tpu.matmul %54, %55, %cst_25 {dimension_numbers = #tpu.dot_dimension_numbers<[1], [0], [0], [1], [0, 0, 1, 1], [], []>} : vector<4x4xbf16>, vector<4x256xbf16>, vector<4x256xf32> -> vector<4x256xf32>
    %57 = arith.addf %41, %56 : vector<4x256xf32>
    %c1_i32_26 = arith.constant 1 : i32
    %58 = tpu.dynamic_rotate %9 by %c1_i32_26 dim 1 : vector<4x256xf32>, i32 -> vector<4x256xf32>
    %c1_i32_27 = arith.constant 1 : i32
    %59 = vector.broadcast %c1_i32_27 : i32 to vector<1x256xi32>
    %60 = arith.cmpi sge, %10, %59 : vector<1x256xi32>
    %cst_28 = arith.constant 0.000000e+00 : f32
    %61 = vector.shape_cast %60 : vector<1x256xi1> to vector<1x256xi1>
    %62 = vector.broadcast %61 : vector<1x256xi1> to vector<4x256xi1>
    %63 = vector.broadcast %cst_28 : f32 to vector<4x256xf32>
    %64 = arith.select %62, %58, %63 : vector<4x256xi1>, vector<4x256xf32>
    %c3 = arith.constant 3 : index
    %c0_29 = arith.constant 0 : index
    %c0_30 = arith.constant 0 : index
    %65 = vector.load %arg4[%c3, %c0_29, %c0_30] : memref<9x4x4xf32, #tpu.memory_space<vmem>>, vector<1x4x4xf32>
    %66 = vector.shape_cast %65 : vector<1x4x4xf32> to vector<4x4xf32>
    %67 = arith.truncf %66 : vector<4x4xf32> to vector<4x4xbf16>
    %68 = arith.truncf %64 : vector<4x256xf32> to vector<4x256xbf16>
    %cst_31 = arith.constant dense<0.000000e+00> : vector<4x256xf32>
    %69 = tpu.matmul %67, %68, %cst_31 {dimension_numbers = #tpu.dot_dimension_numbers<[1], [0], [0], [1], [0, 0, 1, 1], [], []>} : vector<4x4xbf16>, vector<4x256xbf16>, vector<4x256xf32> -> vector<4x256xf32>
    %70 = arith.addf %57, %69 : vector<4x256xf32>
    %c4 = arith.constant 4 : index
    %c0_32 = arith.constant 0 : index
    %c0_33 = arith.constant 0 : index
    %71 = vector.load %arg4[%c4, %c0_32, %c0_33] : memref<9x4x4xf32, #tpu.memory_space<vmem>>, vector<1x4x4xf32>
    %72 = vector.shape_cast %71 : vector<1x4x4xf32> to vector<4x4xf32>
    %73 = arith.truncf %72 : vector<4x4xf32> to vector<4x4xbf16>
    %74 = arith.truncf %9 : vector<4x256xf32> to vector<4x256xbf16>
    %cst_34 = arith.constant dense<0.000000e+00> : vector<4x256xf32>
    %75 = tpu.matmul %73, %74, %cst_34 {dimension_numbers = #tpu.dot_dimension_numbers<[1], [0], [0], [1], [0, 0, 1, 1], [], []>} : vector<4x4xbf16>, vector<4x256xbf16>, vector<4x256xf32> -> vector<4x256xf32>
    %76 = arith.addf %70, %75 : vector<4x256xf32>
    %c255_i32 = arith.constant 255 : i32
    %77 = tpu.dynamic_rotate %9 by %c255_i32 dim 1 : vector<4x256xf32>, i32 -> vector<4x256xf32>
    %c15_i32_35 = arith.constant 15 : i32
    %78 = vector.broadcast %c15_i32_35 : i32 to vector<1x256xi32>
    %79 = arith.cmpi slt, %10, %78 : vector<1x256xi32>
    %cst_36 = arith.constant 0.000000e+00 : f32
    %80 = vector.shape_cast %79 : vector<1x256xi1> to vector<1x256xi1>
    %81 = vector.broadcast %80 : vector<1x256xi1> to vector<4x256xi1>
    %82 = vector.broadcast %cst_36 : f32 to vector<4x256xf32>
    %83 = arith.select %81, %77, %82 : vector<4x256xi1>, vector<4x256xf32>
    %c5 = arith.constant 5 : index
    %c0_37 = arith.constant 0 : index
    %c0_38 = arith.constant 0 : index
    %84 = vector.load %arg4[%c5, %c0_37, %c0_38] : memref<9x4x4xf32, #tpu.memory_space<vmem>>, vector<1x4x4xf32>
    %85 = vector.shape_cast %84 : vector<1x4x4xf32> to vector<4x4xf32>
    %86 = arith.truncf %85 : vector<4x4xf32> to vector<4x4xbf16>
    %87 = arith.truncf %83 : vector<4x256xf32> to vector<4x256xbf16>
    %cst_39 = arith.constant dense<0.000000e+00> : vector<4x256xf32>
    %88 = tpu.matmul %86, %87, %cst_39 {dimension_numbers = #tpu.dot_dimension_numbers<[1], [0], [0], [1], [0, 0, 1, 1], [], []>} : vector<4x4xbf16>, vector<4x256xbf16>, vector<4x256xf32> -> vector<4x256xf32>
    %89 = arith.addf %76, %88 : vector<4x256xf32>
    %c241_i32 = arith.constant 241 : i32
    %90 = tpu.dynamic_rotate %9 by %c241_i32 dim 1 : vector<4x256xf32>, i32 -> vector<4x256xf32>
    %c240_i32 = arith.constant 240 : i32
    %91 = vector.broadcast %c240_i32 : i32 to vector<1x256xi32>
    %92 = arith.cmpi slt, %11, %91 : vector<1x256xi32>
    %c1_i32_40 = arith.constant 1 : i32
    %93 = vector.broadcast %c1_i32_40 : i32 to vector<1x256xi32>
    %94 = arith.cmpi sge, %10, %93 : vector<1x256xi32>
    %95 = arith.andi %92, %94 : vector<1x256xi1>
    %cst_41 = arith.constant 0.000000e+00 : f32
    %96 = vector.shape_cast %95 : vector<1x256xi1> to vector<1x256xi1>
    %97 = vector.broadcast %96 : vector<1x256xi1> to vector<4x256xi1>
    %98 = vector.broadcast %cst_41 : f32 to vector<4x256xf32>
    %99 = arith.select %97, %90, %98 : vector<4x256xi1>, vector<4x256xf32>
    %c6 = arith.constant 6 : index
    %c0_42 = arith.constant 0 : index
    %c0_43 = arith.constant 0 : index
    %100 = vector.load %arg4[%c6, %c0_42, %c0_43] : memref<9x4x4xf32, #tpu.memory_space<vmem>>, vector<1x4x4xf32>
    %101 = vector.shape_cast %100 : vector<1x4x4xf32> to vector<4x4xf32>
    %102 = arith.truncf %101 : vector<4x4xf32> to vector<4x4xbf16>
    %103 = arith.truncf %99 : vector<4x256xf32> to vector<4x256xbf16>
    %cst_44 = arith.constant dense<0.000000e+00> : vector<4x256xf32>
    %104 = tpu.matmul %102, %103, %cst_44 {dimension_numbers = #tpu.dot_dimension_numbers<[1], [0], [0], [1], [0, 0, 1, 1], [], []>} : vector<4x4xbf16>, vector<4x256xbf16>, vector<4x256xf32> -> vector<4x256xf32>
    %105 = arith.addf %89, %104 : vector<4x256xf32>
    %c240_i32_45 = arith.constant 240 : i32
    %106 = tpu.dynamic_rotate %9 by %c240_i32_45 dim 1 : vector<4x256xf32>, i32 -> vector<4x256xf32>
    %c240_i32_46 = arith.constant 240 : i32
    %107 = vector.broadcast %c240_i32_46 : i32 to vector<1x256xi32>
    %108 = arith.cmpi slt, %11, %107 : vector<1x256xi32>
    %cst_47 = arith.constant 0.000000e+00 : f32
    %109 = vector.shape_cast %108 : vector<1x256xi1> to vector<1x256xi1>
    %110 = vector.broadcast %109 : vector<1x256xi1> to vector<4x256xi1>
    %111 = vector.broadcast %cst_47 : f32 to vector<4x256xf32>
    %112 = arith.select %110, %106, %111 : vector<4x256xi1>, vector<4x256xf32>
    %c7 = arith.constant 7 : index
    %c0_48 = arith.constant 0 : index
    %c0_49 = arith.constant 0 : index
    %113 = vector.load %arg4[%c7, %c0_48, %c0_49] : memref<9x4x4xf32, #tpu.memory_space<vmem>>, vector<1x4x4xf32>
    %114 = vector.shape_cast %113 : vector<1x4x4xf32> to vector<4x4xf32>
    %115 = arith.truncf %114 : vector<4x4xf32> to vector<4x4xbf16>
    %116 = arith.truncf %112 : vector<4x256xf32> to vector<4x256xbf16>
    %cst_50 = arith.constant dense<0.000000e+00> : vector<4x256xf32>
    %117 = tpu.matmul %115, %116, %cst_50 {dimension_numbers = #tpu.dot_dimension_numbers<[1], [0], [0], [1], [0, 0, 1, 1], [], []>} : vector<4x4xbf16>, vector<4x256xbf16>, vector<4x256xf32> -> vector<4x256xf32>
    %118 = arith.addf %105, %117 : vector<4x256xf32>
    %c239_i32 = arith.constant 239 : i32
    %119 = tpu.dynamic_rotate %9 by %c239_i32 dim 1 : vector<4x256xf32>, i32 -> vector<4x256xf32>
    %c240_i32_51 = arith.constant 240 : i32
    %120 = vector.broadcast %c240_i32_51 : i32 to vector<1x256xi32>
    %121 = arith.cmpi slt, %11, %120 : vector<1x256xi32>
    %c15_i32_52 = arith.constant 15 : i32
    %122 = vector.broadcast %c15_i32_52 : i32 to vector<1x256xi32>
    %123 = arith.cmpi slt, %10, %122 : vector<1x256xi32>
    %124 = arith.andi %121, %123 : vector<1x256xi1>
    %cst_53 = arith.constant 0.000000e+00 : f32
    %125 = vector.shape_cast %124 : vector<1x256xi1> to vector<1x256xi1>
    %126 = vector.broadcast %125 : vector<1x256xi1> to vector<4x256xi1>
    %127 = vector.broadcast %cst_53 : f32 to vector<4x256xf32>
    %128 = arith.select %126, %119, %127 : vector<4x256xi1>, vector<4x256xf32>
    %c8 = arith.constant 8 : index
    %c0_54 = arith.constant 0 : index
    %c0_55 = arith.constant 0 : index
    %129 = vector.load %arg4[%c8, %c0_54, %c0_55] : memref<9x4x4xf32, #tpu.memory_space<vmem>>, vector<1x4x4xf32>
    %130 = vector.shape_cast %129 : vector<1x4x4xf32> to vector<4x4xf32>
    %131 = arith.truncf %130 : vector<4x4xf32> to vector<4x4xbf16>
    %132 = arith.truncf %128 : vector<4x256xf32> to vector<4x256xbf16>
    %cst_56 = arith.constant dense<0.000000e+00> : vector<4x256xf32>
    %133 = tpu.matmul %131, %132, %cst_56 {dimension_numbers = #tpu.dot_dimension_numbers<[1], [0], [0], [1], [0, 0, 1, 1], [], []>} : vector<4x4xbf16>, vector<4x256xbf16>, vector<4x256xf32> -> vector<4x256xf32>
    %134 = arith.addf %118, %133 : vector<4x256xf32>
    %c0_57 = arith.constant 0 : index
    %c0_58 = arith.constant 0 : index
    %c0_59 = arith.constant 0 : index
    %135 = vector.load %arg6[%c0_57, %c0_58, %c0_59] : memref<1x4x256xf32, #tpu.memory_space<vmem>>, vector<1x4x256xf32>
    %136 = vector.shape_cast %135 : vector<1x4x256xf32> to vector<4x256xf32>
    %137 = vector.shape_cast %134 : vector<4x256xf32> to vector<1x4x256xf32>
    tpu.vector_store %arg6[%c0_57, %c0_58, %c0_59], %137 {strides = array<i32>} : memref<1x4x256xf32, #tpu.memory_space<vmem>>, vector<1x4x256xf32>,
    %cst_60 = arith.constant dense<0.000000e+00> : vector<4xf32>
    %138 = vector.multi_reduction <add>, %134, %cst_60 [1] : vector<4x256xf32> to vector<4xf32>
    %139 = vector.shape_cast %138 : vector<4xf32> to vector<4x1xf32>
    %c0_61 = arith.constant 0 : index
    %c0_62 = arith.constant 0 : index
    %c0_63 = arith.constant 0 : index
    %140 = vector.load %arg7[%c0_61, %c0_62, %c0_63] : memref<1x4x1xf32, #tpu.memory_space<vmem>>, vector<1x4x1xf32>
    %141 = vector.shape_cast %140 : vector<1x4x1xf32> to vector<4x1xf32>
    %142 = vector.shape_cast %139 : vector<4x1xf32> to vector<1x4x1xf32>
    tpu.vector_store %arg7[%c0_61, %c0_62, %c0_63], %142 {strides = array<i32>} : memref<1x4x1xf32, #tpu.memory_space<vmem>>, vector<1x4x1xf32>,
    %143 = arith.mulf %134, %134 : vector<4x256xf32>
    %cst_64 = arith.constant dense<0.000000e+00> : vector<4xf32>
    %144 = vector.multi_reduction <add>, %143, %cst_64 [1] : vector<4x256xf32> to vector<4xf32>
    %145 = vector.shape_cast %144 : vector<4xf32> to vector<4x1xf32>
    %c0_65 = arith.constant 0 : index
    %c0_66 = arith.constant 0 : index
    %c0_67 = arith.constant 0 : index
    %146 = vector.load %arg8[%c0_65, %c0_66, %c0_67] : memref<1x4x1xf32, #tpu.memory_space<vmem>>, vector<1x4x1xf32>
    %147 = vector.shape_cast %146 : vector<1x4x1xf32> to vector<4x1xf32>
    %148 = vector.shape_cast %145 : vector<4x1xf32> to vector<1x4x1xf32>
    tpu.vector_store %arg8[%c0_65, %c0_66, %c0_67], %148 {strides = array<i32>} : memref<1x4x1xf32, #tpu.memory_space<vmem>>, vector<1x4x1xf32>,
    return
  }
  func.func @transform_0(%arg0: i32) -> (i32, i32, i32) {
    %c0_i32 = arith.constant 0 : i32
    %c0_i32_0 = arith.constant 0 : i32
    %c0_i32_1 = arith.constant 0 : i32
    return %arg0, %c0_i32, %c0_i32_0 : i32, i32, i32
  }
  func.func @transform_1(%arg0: i32) -> (i32, i32) {
    %c0_i32 = arith.constant 0 : i32
    %c0_i32_0 = arith.constant 0 : i32
    %c0_i32_1 = arith.constant 0 : i32
    return %c0_i32, %c0_i32_0 : i32, i32
  }
  func.func @transform_2(%arg0: i32) -> (i32, i32) {
    %c0_i32 = arith.constant 0 : i32
    %c0_i32_0 = arith.constant 0 : i32
    %c0_i32_1 = arith.constant 0 : i32
    return %c0_i32, %c0_i32_0 : i32, i32
  }
  func.func @transform_3(%arg0: i32) -> (i32, i32, i32) {
    %c0_i32 = arith.constant 0 : i32
    %c0_i32_0 = arith.constant 0 : i32
    %c0_i32_1 = arith.constant 0 : i32
    %c0_i32_2 = arith.constant 0 : i32
    return %c0_i32, %c0_i32_0, %c0_i32_1 : i32, i32, i32
  }
  func.func @transform_4(%arg0: i32) -> (i32, i32) {
    %c0_i32 = arith.constant 0 : i32
    %c0_i32_0 = arith.constant 0 : i32
    %c0_i32_1 = arith.constant 0 : i32
    return %c0_i32, %c0_i32_0 : i32, i32
  }
  func.func @transform_5(%arg0: i32) -> (i32, i32, i32) {
    %c0_i32 = arith.constant 0 : i32
    %c0_i32_0 = arith.constant 0 : i32
    %c0_i32_1 = arith.constant 0 : i32
    return %arg0, %c0_i32, %c0_i32_0 : i32, i32, i32
  }
  func.func @transform_6(%arg0: i32) -> (i32, i32, i32) {
    %c0_i32 = arith.constant 0 : i32
    %c0_i32_0 = arith.constant 0 : i32
    %c0_i32_1 = arith.constant 0 : i32
    return %arg0, %c0_i32, %c0_i32_0 : i32, i32, i32
  }
  func.func @transform_7(%arg0: i32) -> (i32, i32, i32) {
    %c0_i32 = arith.constant 0 : i32
    %c0_i32_0 = arith.constant 0 : i32
    %c0_i32_1 = arith.constant 0 : i32
    return %arg0, %c0_i32, %c0_i32_0 : i32, i32, i32
  }
}

module attributes {stable_mosaic.version = 11 : i64} {
  func.func @_bn_add_relu_kernel(%arg0: i32, %arg1: memref<1x4x256xf32, #tpu.memory_space<vmem>>, %arg2: memref<4x1xf32, #tpu.memory_space<vmem>>, %arg3: memref<4x1xf32, #tpu.memory_space<vmem>>, %arg4: memref<1x4x256xf32, #tpu.memory_space<vmem>>, %arg5: memref<1x4x256xf32, #tpu.memory_space<vmem>>) attributes {dimension_semantics = [#tpu.dimension_semantics<parallel>], iteration_bounds = array<i64: 2>, scalar_prefetch = 0 : i64, scratch_operands = 0 : i64, tpu.core_type = #tpu.core_type<tc>, window_params = [{transform_indices = @transform_0, window_bounds = array<i64: 1, 4, 256>}, {pipeline_mode = #tpu.pipeline_mode<synchronous>, transform_indices = @transform_1, window_bounds = array<i64: 4, 1>}, {pipeline_mode = #tpu.pipeline_mode<synchronous>, transform_indices = @transform_2, window_bounds = array<i64: 4, 1>}, {transform_indices = @transform_3, window_bounds = array<i64: 1, 4, 256>}, {transform_indices = @transform_4, window_bounds = array<i64: 1, 4, 256>}]} {
    %c0 = arith.constant 0 : index
    %c0_0 = arith.constant 0 : index
    %c0_1 = arith.constant 0 : index
    %0 = vector.load %arg1[%c0, %c0_0, %c0_1] : memref<1x4x256xf32, #tpu.memory_space<vmem>>, vector<1x4x256xf32>
    %1 = vector.shape_cast %0 : vector<1x4x256xf32> to vector<4x256xf32>
    %c0_2 = arith.constant 0 : index
    %c0_3 = arith.constant 0 : index
    %2 = vector.load %arg2[%c0_2, %c0_3] : memref<4x1xf32, #tpu.memory_space<vmem>>, vector<4x1xf32>
    %3 = vector.broadcast %2 : vector<4x1xf32> to vector<4x256xf32>
    %4 = arith.mulf %1, %3 : vector<4x256xf32>
    %c0_4 = arith.constant 0 : index
    %c0_5 = arith.constant 0 : index
    %5 = vector.load %arg3[%c0_4, %c0_5] : memref<4x1xf32, #tpu.memory_space<vmem>>, vector<4x1xf32>
    %6 = vector.broadcast %5 : vector<4x1xf32> to vector<4x256xf32>
    %7 = arith.addf %4, %6 : vector<4x256xf32>
    %c0_6 = arith.constant 0 : index
    %c0_7 = arith.constant 0 : index
    %c0_8 = arith.constant 0 : index
    %8 = vector.load %arg4[%c0_6, %c0_7, %c0_8] : memref<1x4x256xf32, #tpu.memory_space<vmem>>, vector<1x4x256xf32>
    %9 = vector.shape_cast %8 : vector<1x4x256xf32> to vector<4x256xf32>
    %10 = arith.addf %7, %9 : vector<4x256xf32>
    %cst = arith.constant 0.000000e+00 : f32
    %11 = vector.broadcast %cst : f32 to vector<4x256xf32>
    %12 = arith.maximumf %10, %11 : vector<4x256xf32>
    %c0_9 = arith.constant 0 : index
    %c0_10 = arith.constant 0 : index
    %c0_11 = arith.constant 0 : index
    %13 = vector.load %arg5[%c0_9, %c0_10, %c0_11] : memref<1x4x256xf32, #tpu.memory_space<vmem>>, vector<1x4x256xf32>
    %14 = vector.shape_cast %13 : vector<1x4x256xf32> to vector<4x256xf32>
    %15 = vector.shape_cast %12 : vector<4x256xf32> to vector<1x4x256xf32>
    tpu.vector_store %arg5[%c0_9, %c0_10, %c0_11], %15 {strides = array<i32>} : memref<1x4x256xf32, #tpu.memory_space<vmem>>, vector<1x4x256xf32>,
    return
  }
  func.func @transform_0(%arg0: i32) -> (i32, i32, i32) {
    %c0_i32 = arith.constant 0 : i32
    %c0_i32_0 = arith.constant 0 : i32
    %c0_i32_1 = arith.constant 0 : i32
    return %arg0, %c0_i32, %c0_i32_0 : i32, i32, i32
  }
  func.func @transform_1(%arg0: i32) -> (i32, i32) {
    %c0_i32 = arith.constant 0 : i32
    %c0_i32_0 = arith.constant 0 : i32
    %c0_i32_1 = arith.constant 0 : i32
    return %c0_i32, %c0_i32_0 : i32, i32
  }
  func.func @transform_2(%arg0: i32) -> (i32, i32) {
    %c0_i32 = arith.constant 0 : i32
    %c0_i32_0 = arith.constant 0 : i32
    %c0_i32_1 = arith.constant 0 : i32
    return %c0_i32, %c0_i32_0 : i32, i32
  }
  func.func @transform_3(%arg0: i32) -> (i32, i32, i32) {
    %c0_i32 = arith.constant 0 : i32
    %c0_i32_0 = arith.constant 0 : i32
    %c0_i32_1 = arith.constant 0 : i32
    return %arg0, %c0_i32, %c0_i32_0 : i32, i32, i32
  }
  func.func @transform_4(%arg0: i32) -> (i32, i32, i32) {
    %c0_i32 = arith.constant 0 : i32
    %c0_i32_0 = arith.constant 0 : i32
    %c0_i32_1 = arith.constant 0 : i32
    return %arg0, %c0_i32, %c0_i32_0 : i32, i32, i32
  }
}

</mosaic_0001>

<llo_original>
// kernel: residual_block.5
$region0: #{residual_block.5}
  #allocation0 [shape = 'u32[]', space=smem, size = 0x4, offset = 0x4, fixed_abs, tag = 'smem constant byte address 0x4 - core index']
  #allocation1 [shape = 'u32[144,128]{1,0:T(1,128)}', space=vmem, size = 0x12000, scoped, tag = 'internal scratch']
  %s0 = inlined_call_operand.vmem [shape: f32[2,4,256], index: 0, kind: input, shape index: {}]
  %s1 = inlined_call_operand.vmem [shape: f32[4,1], index: 1, kind: input, shape index: {}]
  %s2 = inlined_call_operand.vmem [shape: f32[4,1], index: 2, kind: input, shape index: {}]
  %s3 = inlined_call_operand.vmem [shape: f32[2,4,256], index: 3, kind: input, shape index: {}]
  %s4 = inlined_call_operand.vmem [shape: f32[2,4,256], index: 4, kind: output, shape index: {}]
  %s5 = sld [smem:[#allocation0]]
  $region49: #{residual_block.5} parent=0
    _
  %s7 = ssub.s32 1, %s5
  %s8 = scalar_select 0, %s7, %s5
  loop: start=0, step=1, limit=4
  $region2: #{residual_block.5} parent=0 // loop_pre_header
    _
  $region3: #{residual_block.5} parent=0 // loop_header
    %s10 = sphi 0, %s14
    %p11 = scmp.ge.s32.totalorder %s10, 4
    %s20 = sphi 0, %s22
    %s23 = sphi 0, %s20
    %s24 = sphi 0, %s23
    %s40 = sphi 0, %s24
    %s44 = sphi 0, %s44
    %s46 = sphi 0, %s44
    %s47 = sphi 0, %s46
    %s61 = sphi 0, %s47
    %s65 = sphi 0, %s65
    %s67 = sphi 0, %s65
    %s68 = sphi 0, %s67
    %s82 = sphi 0, %s68
    %s88 = sphi 0, %s90
    %s91 = sphi 0, %s88
    %s92 = sphi 0, %s91
    %s108 = sphi 0, %s92
    %s114 = sphi 0, %s116
    %s117 = sphi 0, %s114
    %s118 = sphi 0, %s117
    %s134 = sphi 0, %s118
  $region4: #{residual_block.5} parent=0 // loop_header_branch
    %13 = sbr.rel (%p11) target = $region8
  $region5: #{residual_block.5} parent=0 // loop_body
    %s15 = ssub.s32 %s10, 1
    %s16 = ssub.s32 %s10, 2
    %s17 = sadd.s32 %s10, 1
    %s18 = ssub.s32 %s10, %s17
    %p19 = scmp.eq.s32.totalorder %s18, 0
    %s21 = sadd.s32 %s20, 1
    %s22 = scalar_select %p19, %s20, %s21
    %p25 = pneg %p19
    %p26 = scmp.eq.s32.totalorder %s10, 1
    %p27 = por %p25, %p26
    %p28 = scmp.ne.s32.totalorder %s20, %s23
    %p29 = scmp.eq.s32.totalorder %s10, 0
    %p30 = por %p28, %p29
    %p31 = scmp.ne.s32.totalorder %s20, %s23
    %p32 = scmp.eq.s32.totalorder %s15, 1
    %p33 = por %p31, %p32
    %p34 = scmp.ne.s32.totalorder %s23, %s24
    %p35 = scmp.eq.s32.totalorder %s15, 0
    %p36 = por %p34, %p35
    %p37 = scmp.ne.s32.totalorder %s23, %s24
    %p38 = scmp.eq.s32.totalorder %s16, 1
    %p39 = por %p37, %p38
    %p41 = scmp.ne.s32.totalorder %s24, %s40
    %p42 = scmp.eq.s32.totalorder %s16, 0
    %p43 = por %p41, %p42
    %s45 = sadd.s32 %s44, 1
    %p48 = scmp.eq.s32.totalorder %s10, 1
    %p49 = scmp.ne.s32.totalorder %s44, %s46
    %p50 = scmp.eq.s32.totalorder %s10, 0
    %p51 = por %p49, %p50
    %p52 = scmp.ne.s32.totalorder %s44, %s46
    %p53 = scmp.eq.s32.totalorder %s15, 1
    %p54 = por %p52, %p53
    %p55 = scmp.ne.s32.totalorder %s46, %s47
    %p56 = scmp.eq.s32.totalorder %s15, 0
    %p57 = por %p55, %p56
    %p58 = scmp.ne.s32.totalorder %s46, %s47
    %p59 = scmp.eq.s32.totalorder %s16, 1
    %p60 = por %p58, %p59
    %p62 = scmp.ne.s32.totalorder %s47, %s61
    %p63 = scmp.eq.s32.totalorder %s16, 0
    %p64 = por %p62, %p63
    %s66 = sadd.s32 %s65, 1
    %p69 = scmp.eq.s32.totalorder %s10, 1
    %p70 = scmp.ne.s32.totalorder %s65, %s67
    %p71 = scmp.eq.s32.totalorder %s10, 0
    %p72 = por %p70, %p71
    %p73 = scmp.ne.s32.totalorder %s65, %s67
    %p74 = scmp.eq.s32.totalorder %s15, 1
    %p75 = por %p73, %p74
    %p76 = scmp.ne.s32.totalorder %s67, %s68
    %p77 = scmp.eq.s32.totalorder %s15, 0
    %p78 = por %p76, %p77
    %p79 = scmp.ne.s32.totalorder %s67, %s68
    %p80 = scmp.eq.s32.totalorder %s16, 1
    %p81 = por %p79, %p80
    %p83 = scmp.ne.s32.totalorder %s68, %s82
    %p84 = scmp.eq.s32.totalorder %s16, 0
    %p85 = por %p83, %p84
    %s86 = ssub.s32 %s10, %s17
    %p87 = scmp.eq.s32.totalorder %s86, 0
    %s89 = sadd.s32 %s88, 1
    %s90 = scalar_select %p87, %s88, %s89
    %p93 = pneg %p87
    %p94 = scmp.eq.s32.totalorder %s10, 1
    %p95 = por %p93, %p94
    %p96 = scmp.ne.s32.totalorder %s88, %s91
    %p97 = scmp.eq.s32.totalorder %s10, 0
    %p98 = por %p96, %p97
    %p99 = scmp.ne.s32.totalorder %s88, %s91
    %p100 = scmp.eq.s32.totalorder %s15, 1
    %p101 = por %p99, %p100
    %p102 = scmp.ne.s32.totalorder %s91, %s92
    %p103 = scmp.eq.s32.totalorder %s15, 0
    %p104 = por %p102, %p103
    %p105 = scmp.ne.s32.totalorder %s91, %s92
    %p106 = scmp.eq.s32.totalorder %s16, 1
    %p107 = por %p105, %p106
    %p109 = scmp.ne.s32.totalorder %s92, %s108
    %p110 = scmp.eq.s32.totalorder %s16, 0
    %p111 = por %p109, %p110
    %s112 = ssub.s32 %s10, %s17
    %p113 = scmp.eq.s32.totalorder %s112, 0
    %s115 = sadd.s32 %s114, 1
    %s116 = scalar_select %p113, %s114, %s115
    %p119 = pneg %p113
    %p120 = scmp.eq.s32.totalorder %s10, 1
    %p121 = por %p119, %p120
    %p122 = scmp.ne.s32.totalorder %s114, %s117
    %p123 = scmp.eq.s32.totalorder %s10, 0
    %p124 = por %p122, %p123
    %p125 = scmp.ne.s32.totalorder %s114, %s117
    %p126 = scmp.eq.s32.totalorder %s15, 1
    %p127 = por %p125, %p126
    %p128 = scmp.ne.s32.totalorder %s117, %s118
    %p129 = scmp.eq.s32.totalorder %s15, 0
    %p130 = por %p128, %p129
    %p131 = scmp.ne.s32.totalorder %s117, %s118
    %p132 = scmp.eq.s32.totalorder %s16, 1
    %p133 = por %p131, %p132
    %p135 = scmp.ne.s32.totalorder %s118, %s134
    %p136 = scmp.eq.s32.totalorder %s16, 0
    %p137 = por %p135, %p136
    %p138 = scmp.le.s32.totalorder 1, %s10
    %p139 = scmp.lt.s32.totalorder %s10, 3
    %p140 = pnand %p138, %p139
    %p141 = pneg %p140
    // Predicated region
    $region9: #{residual_block.5} parent=5 // pred_check
      _
    $region10: #{residual_block.5} parent=5 // pred_check_branch
      %143 = sbr.rel (%p140) target = $region12
    $region11: #{residual_block.5} parent=5 // pred_region
      %s144 = ssub.s32 %s10, 1
      // Predicated region
      $region13: #{residual_block.5} parent=11 // pred_check
        %p145 = pneg %p57
      $region14: #{residual_block.5} parent=11 // pred_check_branch
        %147 = sbr.rel (%p145) target = $region16
      $region15: #{residual_block.5} parent=11 // pred_region
        _
      $region16: #{residual_block.5} parent=11 // pred_fallthru
        _
      // Predicated region
      $region17: #{residual_block.5} parent=11 // pred_check
        %p148 = pneg %p78
      $region18: #{residual_block.5} parent=11 // pred_check_branch
        %150 = sbr.rel (%p148) target = $region20
      $region19: #{residual_block.5} parent=11 // pred_region
        _
      $region20: #{residual_block.5} parent=11 // pred_fallthru
        _
    $region12: #{residual_block.5} parent=5 // pred_fallthru
      _
    %p151 = scmp.lt.s32.totalorder %s10, 2
    // Predicated region
    $region21: #{residual_block.5} parent=5 // pred_check
      %p152 = pneg %p151
    $region22: #{residual_block.5} parent=5 // pred_check_branch
      %154 = sbr.rel (%p152) target = $region24
    $region23: #{residual_block.5} parent=5 // pred_region
      // Predicated region
      $region25: #{residual_block.5} parent=23 // pred_check
        %p155 = pneg %p30
      $region26: #{residual_block.5} parent=23 // pred_check_branch
        %157 = sbr.rel (%p155) target = $region28
      $region27: #{residual_block.5} parent=23 // pred_region
        %p158 = scmp.lt.s32.totalorder %s10, 1
        %s159 = scalar_select %p158, %s10, 1
        %s160 = smul.addr %s159, 2
        %s161 = smul.addr %s160, 4
        %s162 = scalar_lea.vmem %s0, %s161
      $region28: #{residual_block.5} parent=23 // pred_fallthru
        _
      // Predicated region
      $region29: #{residual_block.5} parent=23 // pred_check
        %p163 = pneg %p98
      $region30: #{residual_block.5} parent=23 // pred_check_branch
        %165 = sbr.rel (%p163) target = $region32
      $region31: #{residual_block.5} parent=23 // pred_region
        %p166 = scmp.lt.s32.totalorder %s10, 1
        %s167 = scalar_select %p166, %s10, 1
        %s168 = smul.addr %s167, 2
        %s169 = smul.addr %s168, 4
        %s170 = scalar_lea.vmem %s3, %s169
      $region32: #{residual_block.5} parent=23 // pred_fallthru
        _
    $region24: #{residual_block.5} parent=5 // pred_fallthru
      _
    %p171 = scmp.le.s32.totalorder 1, %s10
    %p172 = scmp.lt.s32.totalorder %s10, 3
    %p173 = pnand %p171, %p172
    %p174 = pneg %p173
    // Predicated region
    $region33: #{residual_block.5} parent=5 // pred_check
      _
    $region34: #{residual_block.5} parent=5 // pred_check_branch
      %176 = sbr.rel (%p173) target = $region36
    $region35: #{residual_block.5} parent=5 // pred_region
      %s177 = ssub.s32 %s10, 1
      %p178 = scmp.lt.s32.totalorder %s15, 1
      %s179 = scalar_select %p178, %s15, 1
      %s180 = smul.addr %s179, 2
      %s181 = smul.addr %s180, 4
      %s182 = scalar_lea.vmem %s0, %s181
      %p183 = pneg %p36
      %p184 = pneg %p33
      %p185 = pneg %p57
      %p186 = pneg %p54
      %p187 = pneg %p78
      %p188 = pneg %p75
      %p189 = scmp.lt.s32.totalorder %s15, 1
      %s190 = scalar_select %p189, %s15, 1
      %s191 = smul.addr %s190, 2
      %s192 = smul.addr %s191, 4
      %s193 = scalar_lea.vmem %s3, %s192
      %p194 = pneg %p104
      %p195 = pneg %p101
      %p196 = pneg %p130
      %p197 = pneg %p127
      %p198 = scmp.lt.s32.totalorder %s15, 1
      %s199 = scalar_select %p198, %s15, 1
      %s200 = smul.addr %s199, 2
      %s201 = smul.addr %s200, 4
      %s202 = scalar_lea.vmem %s4, %s201
      %p203 = scmp.lt.s32.totalorder %s15, 1
      %s204 = scalar_select %p203, %s15, 1
      %s205 = smul.addr %s204, 2
      %s206 = smul.addr %s205, 4
      %s207 = scalar_lea.vmem %s0, %s206
      %p208 = scmp.lt.s32.totalorder %s15, 1
      %s209 = scalar_select %p208, %s15, 1
      %s210 = smul.addr %s209, 2
      %s211 = smul.addr %s210, 4
      %s212 = scalar_lea.vmem %s3, %s211
      %p213 = scmp.lt.s32.totalorder %s15, 1
      %s214 = scalar_select %p213, %s15, 1
      %s215 = smul.addr %s214, 2
      %s216 = smul.addr %s215, 4
      %s217 = scalar_lea.vmem %s4, %s216
      %v218 = vld [vmem:[%s207] sm:$0xff]
      %v219 = vld [vmem:[%s1] sm:$0xf]
      %221 = vset.pattern.permute.xlu0 0
      %222 = vperm.xlu0 %221, %v219
      %v223 = vpop.permute.xlu0 %222
      %v225 = vunpack.c.l.s4 839922192
      %v226 = vunpack.c.0.s8 %v225
      %v227 = vlaneseq
      %v228 = vshrl.u32 %v227, 7
      %v229 = vsub.s32 %v226, %v228
      %v230 = vrot.slane %v223, %v229
      %v232 = vmul.f32 %v218, %v230
      %v233 = vld [vmem:[%s2] sm:$0xf]
      %235 = vset.pattern.permute.xlu0 0
      %236 = vperm.xlu0 %235, %v233
      %v237 = vpop.permute.xlu0 %236
      %v239 = vunpack.c.l.s4 839922192
      %v240 = vunpack.c.0.s8 %v239
      %v241 = vlaneseq
      %v242 = vshrl.u32 %v241, 7
      %v243 = vsub.s32 %v240, %v242
      %v244 = vrot.slane %v237, %v243
      %v246 = vadd.f32 %v232, %v244
      %v247 = vld [vmem:[%s212] sm:$0xff]
      %v248 = vadd.f32 %v246, %v247
      %v249 = vmax.f32 %v248, 0.0
      %250 = vst [vmem:[%s217] sm:$0xff] %v249
      %p251 = scmp.lt.s32.totalorder %s15, 1
      %s252 = scalar_select %p251, %s15, 1
      %s253 = smul.addr %s252, 2
      %s254 = smul.addr %s253, 4
      %s255 = scalar_lea.vmem %s4, %s254
      // Predicated region
      $region37: #{residual_block.5} parent=35 // pred_check
        %p256 = pneg %p127
      $region38: #{residual_block.5} parent=35 // pred_check_branch
        %258 = sbr.rel (%p256) target = $region40
      $region39: #{residual_block.5} parent=35 // pred_region
        _
      $region40: #{residual_block.5} parent=35 // pred_fallthru
        _
    $region36: #{residual_block.5} parent=5 // pred_fallthru
      _
    %p259 = scmp.le.s32.totalorder 2, %s10
    // Predicated region
    $region41: #{residual_block.5} parent=5 // pred_check
      %p260 = pneg %p259
    $region42: #{residual_block.5} parent=5 // pred_check_branch
      %262 = sbr.rel (%p260) target = $region44
    $region43: #{residual_block.5} parent=5 // pred_region
      %s263 = ssub.s32 %s10, 2
      // Predicated region
      $region45: #{residual_block.5} parent=43 // pred_check
        %p264 = pneg %p133
      $region46: #{residual_block.5} parent=43 // pred_check_branch
        %266 = sbr.rel (%p264) target = $region48
      $region47: #{residual_block.5} parent=43 // pred_region
        %p267 = scmp.lt.s32.totalorder %s16, 1
        %s268 = scalar_select %p267, %s16, 1
        %s269 = smul.addr %s268, 2
        %s270 = smul.addr %s269, 4
        %s271 = scalar_lea.vmem %s4, %s270
      $region48: #{residual_block.5} parent=43 // pred_fallthru
        _
    $region44: #{residual_block.5} parent=5 // pred_fallthru
      _
  $region6: #{residual_block.5} parent=0 // loop_footer
    %s14 = sadd.s32 1, %s10
  $region7: #{residual_block.5} parent=0 // loop_footer_branch
    %9 = sbr.rel target = $region3
  $region8: #{residual_block.5} parent=0 // loop_exit
    _

// kernel: residual_block.3
$region0: #{residual_block.3}
  #allocation0 [shape = 'u32[]', space=smem, size = 0x4, offset = 0x4, fixed_abs, tag = 'smem constant byte address 0x4 - core index']
  #allocation1 [shape = 'u32[144,128]{1,0:T(1,128)}', space=vmem, size = 0x12000, scoped, tag = 'internal scratch']
  %s0 = inlined_call_operand.vmem [shape: f32[2,4,256], index: 0, kind: input, shape index: {}]
  %s1 = inlined_call_operand.vmem [shape: f32[9,4,4], index: 1, kind: input, shape index: {}]
  %s2 = inlined_call_operand.vmem [shape: s32[1,256], index: 2, kind: input, shape index: {}]
  %s3 = inlined_call_operand.vmem [shape: f32[2,4,256], index: 3, kind: output, shape index: {0}]
  %s4 = inlined_call_operand.vmem [shape: f32[2,4,1], index: 4, kind: output, shape index: {1}]
  %s5 = inlined_call_operand.vmem [shape: f32[2,4,1], index: 5, kind: output, shape index: {2}]
  %6 = xla_tuple %s3, %s4, %s5
  %s7 = sld [smem:[#allocation0]]
  $region61: #{residual_block.3} parent=0
    _
  %s9 = ssub.s32 1, %s7
  %s10 = scalar_select 0, %s9, %s7
  loop: start=0, step=1, limit=4
  $region2: #{residual_block.3} parent=0 // loop_pre_header
    _
  $region3: #{residual_block.3} parent=0 // loop_header
    %s12 = sphi 0, %s16
    %p13 = scmp.ge.s32.totalorder %s12, 4
    %s22 = sphi 0, %s24
    %s25 = sphi 0, %s22
    %s26 = sphi 0, %s25
    %s42 = sphi 0, %s26
    %s46 = sphi 0, %s46
    %s48 = sphi 0, %s46
    %s49 = sphi 0, %s48
    %s63 = sphi 0, %s49
    %s67 = sphi 0, %s67
    %s69 = sphi 0, %s67
    %s70 = sphi 0, %s69
    %s84 = sphi 0, %s70
    %s90 = sphi 0, %s92
    %s93 = sphi 0, %s90
    %s94 = sphi 0, %s93
    %s110 = sphi 0, %s94
    %s116 = sphi 0, %s118
    %s119 = sphi 0, %s116
    %s120 = sphi 0, %s119
    %s136 = sphi 0, %s120
    %s142 = sphi 0, %s144
    %s145 = sphi 0, %s142
    %s146 = sphi 0, %s145
    %s162 = sphi 0, %s146
  $region4: #{residual_block.3} parent=0 // loop_header_branch
    %15 = sbr.rel (%p13) target = $region8
  $region5: #{residual_block.3} parent=0 // loop_body
    %s17 = ssub.s32 %s12, 1
    %s18 = ssub.s32 %s12, 2
    %s19 = sadd.s32 %s12, 1
    %s20 = ssub.s32 %s12, %s19
    %p21 = scmp.eq.s32.totalorder %s20, 0
    %s23 = sadd.s32 %s22, 1
    %s24 = scalar_select %p21, %s22, %s23
    %p27 = pneg %p21
    %p28 = scmp.eq.s32.totalorder %s12, 1
    %p29 = por %p27, %p28
    %p30 = scmp.ne.s32.totalorder %s22, %s25
    %p31 = scmp.eq.s32.totalorder %s12, 0
    %p32 = por %p30, %p31
    %p33 = scmp.ne.s32.totalorder %s22, %s25
    %p34 = scmp.eq.s32.totalorder %s17, 1
    %p35 = por %p33, %p34
    %p36 = scmp.ne.s32.totalorder %s25, %s26
    %p37 = scmp.eq.s32.totalorder %s17, 0
    %p38 = por %p36, %p37
    %p39 = scmp.ne.s32.totalorder %s25, %s26
    %p40 = scmp.eq.s32.totalorder %s18, 1
    %p41 = por %p39, %p40
    %p43 = scmp.ne.s32.totalorder %s26, %s42
    %p44 = scmp.eq.s32.totalorder %s18, 0
    %p45 = por %p43, %p44
    %s47 = sadd.s32 %s46, 1
    %p50 = scmp.eq.s32.totalorder %s12, 1
    %p51 = scmp.ne.s32.totalorder %s46, %s48
    %p52 = scmp.eq.s32.totalorder %s12, 0
    %p53 = por %p51, %p52
    %p54 = scmp.ne.s32.totalorder %s46, %s48
    %p55 = scmp.eq.s32.totalorder %s17, 1
    %p56 = por %p54, %p55
    %p57 = scmp.ne.s32.totalorder %s48, %s49
    %p58 = scmp.eq.s32.totalorder %s17, 0
    %p59 = por %p57, %p58
    %p60 = scmp.ne.s32.totalorder %s48, %s49
    %p61 = scmp.eq.s32.totalorder %s18, 1
    %p62 = por %p60, %p61
    %p64 = scmp.ne.s32.totalorder %s49, %s63
    %p65 = scmp.eq.s32.totalorder %s18, 0
    %p66 = por %p64, %p65
    %s68 = sadd.s32 %s67, 1
    %p71 = scmp.eq.s32.totalorder %s12, 1
    %p72 = scmp.ne.s32.totalorder %s67, %s69
    %p73 = scmp.eq.s32.totalorder %s12, 0
    %p74 = por %p72, %p73
    %p75 = scmp.ne.s32.totalorder %s67, %s69
    %p76 = scmp.eq.s32.totalorder %s17, 1
    %p77 = por %p75, %p76
    %p78 = scmp.ne.s32.totalorder %s69, %s70
    %p79 = scmp.eq.s32.totalorder %s17, 0
    %p80 = por %p78, %p79
    %p81 = scmp.ne.s32.totalorder %s69, %s70
    %p82 = scmp.eq.s32.totalorder %s18, 1
    %p83 = por %p81, %p82
    %p85 = scmp.ne.s32.totalorder %s70, %s84
    %p86 = scmp.eq.s32.totalorder %s18, 0
    %p87 = por %p85, %p86
    %s88 = ssub.s32 %s12, %s19
    %p89 = scmp.eq.s32.totalorder %s88, 0
    %s91 = sadd.s32 %s90, 1
    %s92 = scalar_select %p89, %s90, %s91
    %p95 = pneg %p89
    %p96 = scmp.eq.s32.totalorder %s12, 1
    %p97 = por %p95, %p96
    %p98 = scmp.ne.s32.totalorder %s90, %s93
    %p99 = scmp.eq.s32.totalorder %s12, 0
    %p100 = por %p98, %p99
    %p101 = scmp.ne.s32.totalorder %s90, %s93
    %p102 = scmp.eq.s32.totalorder %s17, 1
    %p103 = por %p101, %p102
    %p104 = scmp.ne.s32.totalorder %s93, %s94
    %p105 = scmp.eq.s32.totalorder %s17, 0
    %p106 = por %p104, %p105
    %p107 = scmp.ne.s32.totalorder %s93, %s94
    %p108 = scmp.eq.s32.totalorder %s18, 1
    %p109 = por %p107, %p108
    %p111 = scmp.ne.s32.totalorder %s94, %s110
    %p112 = scmp.eq.s32.totalorder %s18, 0
    %p113 = por %p111, %p112
    %s114 = ssub.s32 %s12, %s19
    %p115 = scmp.eq.s32.totalorder %s114, 0
    %s117 = sadd.s32 %s116, 1
    %s118 = scalar_select %p115, %s116, %s117
    %p121 = pneg %p115
    %p122 = scmp.eq.s32.totalorder %s12, 1
    %p123 = por %p121, %p122
    %p124 = scmp.ne.s32.totalorder %s116, %s119
    %p125 = scmp.eq.s32.totalorder %s12, 0
    %p126 = por %p124, %p125
    %p127 = scmp.ne.s32.totalorder %s116, %s119
    %p128 = scmp.eq.s32.totalorder %s17, 1
    %p129 = por %p127, %p128
    %p130 = scmp.ne.s32.totalorder %s119, %s120
    %p131 = scmp.eq.s32.totalorder %s17, 0
    %p132 = por %p130, %p131
    %p133 = scmp.ne.s32.totalorder %s119, %s120
    %p134 = scmp.eq.s32.totalorder %s18, 1
    %p135 = por %p133, %p134
    %p137 = scmp.ne.s32.totalorder %s120, %s136
    %p138 = scmp.eq.s32.totalorder %s18, 0
    %p139 = por %p137, %p138
    %s140 = ssub.s32 %s12, %s19
    %p141 = scmp.eq.s32.totalorder %s140, 0
    %s143 = sadd.s32 %s142, 1
    %s144 = scalar_select %p141, %s142, %s143
    %p147 = pneg %p141
    %p148 = scmp.eq.s32.totalorder %s12, 1
    %p149 = por %p147, %p148
    %p150 = scmp.ne.s32.totalorder %s142, %s145
    %p151 = scmp.eq.s32.totalorder %s12, 0
    %p152 = por %p150, %p151
    %p153 = scmp.ne.s32.totalorder %s142, %s145
    %p154 = scmp.eq.s32.totalorder %s17, 1
    %p155 = por %p153, %p154
    %p156 = scmp.ne.s32.totalorder %s145, %s146
    %p157 = scmp.eq.s32.totalorder %s17, 0
    %p158 = por %p156, %p157
    %p159 = scmp.ne.s32.totalorder %s145, %s146
    %p160 = scmp.eq.s32.totalorder %s18, 1
    %p161 = por %p159, %p160
    %p163 = scmp.ne.s32.totalorder %s146, %s162
    %p164 = scmp.eq.s32.totalorder %s18, 0
    %p165 = por %p163, %p164
    %p166 = scmp.le.s32.totalorder 1, %s12
    %p167 = scmp.lt.s32.totalorder %s12, 3
    %p168 = pnand %p166, %p167
    %p169 = pneg %p168
    // Predicated region
    $region9: #{residual_block.3} parent=5 // pred_check
      _
    $region10: #{residual_block.3} parent=5 // pred_check_branch
      %171 = sbr.rel (%p168) target = $region12
    $region11: #{residual_block.3} parent=5 // pred_region
      %s172 = ssub.s32 %s12, 1
      // Predicated region
      $region13: #{residual_block.3} parent=11 // pred_check
        %p173 = pneg %p59
      $region14: #{residual_block.3} parent=11 // pred_check_branch
        %175 = sbr.rel (%p173) target = $region16
      $region15: #{residual_block.3} parent=11 // pred_region
        _
      $region16: #{residual_block.3} parent=11 // pred_fallthru
        _
      // Predicated region
      $region17: #{residual_block.3} parent=11 // pred_check
        %p176 = pneg %p80
      $region18: #{residual_block.3} parent=11 // pred_check_branch
        %178 = sbr.rel (%p176) target = $region20
      $region19: #{residual_block.3} parent=11 // pred_region
        _
      $region20: #{residual_block.3} parent=11 // pred_fallthru
        _
    $region12: #{residual_block.3} parent=5 // pred_fallthru
      _
    %p179 = scmp.lt.s32.totalorder %s12, 2
    // Predicated region
    $region21: #{residual_block.3} parent=5 // pred_check
      %p180 = pneg %p179
    $region22: #{residual_block.3} parent=5 // pred_check_branch
      %182 = sbr.rel (%p180) target = $region24
    $region23: #{residual_block.3} parent=5 // pred_region
      // Predicated region
      $region25: #{residual_block.3} parent=23 // pred_check
        %p183 = pneg %p32
      $region26: #{residual_block.3} parent=23 // pred_check_branch
        %185 = sbr.rel (%p183) target = $region28
      $region27: #{residual_block.3} parent=23 // pred_region
        %p186 = scmp.lt.s32.totalorder %s12, 1
        %s187 = scalar_select %p186, %s12, 1
        %s188 = smul.addr %s187, 2
        %s189 = smul.addr %s188, 4
        %s190 = scalar_lea.vmem %s0, %s189
      $region28: #{residual_block.3} parent=23 // pred_fallthru
        _
    $region24: #{residual_block.3} parent=5 // pred_fallthru
      _
    %p191 = scmp.le.s32.totalorder 1, %s12
    %p192 = scmp.lt.s32.totalorder %s12, 3
    %p193 = pnand %p191, %p192
    %p194 = pneg %p193
    // Predicated region
    $region29: #{residual_block.3} parent=5 // pred_check
      _
    $region30: #{residual_block.3} parent=5 // pred_check_branch
      %196 = sbr.rel (%p193) target = $region32
    $region31: #{residual_block.3} parent=5 // pred_region
      %s197 = ssub.s32 %s12, 1
      %p198 = scmp.lt.s32.totalorder %s17, 1
      %s199 = scalar_select %p198, %s17, 1
      %s200 = smul.addr %s199, 2
      %s201 = smul.addr %s200, 4
      %s202 = scalar_lea.vmem %s0, %s201
      %p203 = pneg %p38
      %p204 = pneg %p35
      %p205 = pneg %p59
      %p206 = pneg %p56
      %p207 = pneg %p80
      %p208 = pneg %p77
      %p209 = pneg %p106
      %p210 = pneg %p103
      %p211 = scmp.lt.s32.totalorder %s17, 1
      %s212 = scalar_select %p211, %s17, 1
      %s213 = smul.addr %s212, 2
      %s214 = smul.addr %s213, 4
      %s215 = scalar_lea.vmem %s3, %s214
      %p216 = pneg %p132
      %p217 = pneg %p129
      %p218 = scmp.lt.s32.totalorder %s17, 1
      %s219 = scalar_select %p218, %s17, 1
      %s220 = smul.addr %s219, 4
      %s221 = scalar_lea.vmem %s4, %s220
      %p222 = pneg %p158
      %p223 = pneg %p155
      %p224 = scmp.lt.s32.totalorder %s17, 1
      %s225 = scalar_select %p224, %s17, 1
      %s226 = smul.addr %s225, 4
      %s227 = scalar_lea.vmem %s5, %s226
      %p228 = scmp.lt.s32.totalorder %s17, 1
      %s229 = scalar_select %p228, %s17, 1
      %s230 = smul.addr %s229, 2
      %s231 = smul.addr %s230, 4
      %s232 = scalar_lea.vmem %s0, %s231
      %p233 = scmp.lt.s32.totalorder %s17, 1
      %s234 = scalar_select %p233, %s17, 1
      %s235 = smul.addr %s234, 2
      %s236 = smul.addr %s235, 4
      %s237 = scalar_lea.vmem %s3, %s236
      %p238 = scmp.lt.s32.totalorder %s17, 1
      %s239 = scalar_select %p238, %s17, 1
      %s240 = smul.addr %s239, 4
      %s241 = scalar_lea.vmem %s4, %s240
      %p242 = scmp.lt.s32.totalorder %s17, 1
      %s243 = scalar_select %p242, %s17, 1
      %s244 = smul.addr %s243, 4
      %s245 = scalar_lea.vmem %s5, %s244
      %v247 = vld [vmem:[%s232] sm:$0xff]
      %v248 = vld [vmem:[%s2] sm:$0x3]
      %v249 = vlaneseq
      %v250 = vand.u32 %v249, 127
      %v251 = vadd.s32 %v250, 128
      %v253 = vcombine.high %v247, %v247
      %255 = vrot.lane.b32.xlu0 %v247, 17
      %v256 = vpop.permute.xlu0 %255
      %257 = vrot.lane.b32.xlu0 %v253, 17
      %v258 = vpop.permute.xlu0 %257
      %vm259 = vcmp.lt.s32.totalorder %v250, 17
      %v260 = vsel %vm259, %v256, %v258
      %v261 = vsel %vm259, %v258, %v256
      %vm262 = vcmp.ge.s32.totalorder %v250, 16
      %vm263 = vcmp.ge.s32.totalorder %v251, 16
      %vm264 = vcmp.ge.s32.totalorder %v248, 1
      %v265 = vsel %vm264, 1, 0
      %v266 = vlaneseq
      %v267 = vshrl.u32 %v266, 7
      %v268 = vsub.s32 0, %v267
      %v269 = vrot.slane %v265, %v268
      %v270 = vlaneseq
      %v271 = vshrl.u32 %v270, 7
      %v272 = vsub.s32 1, %v271
      %v273 = vrot.slane %v265, %v272
      %vm274 = vcmp.ne.s32.totalorder %v269, 0
      %vm275 = vcmp.ne.s32.totalorder %v273, 0
      %vm276 = vmand %vm262, %vm274
      %vm277 = vmand %vm263, %vm275
      %v278 = vsel %vm276, 1, 0
      %v279 = vsel %vm277, 1, 0
      %v280 = vlaneseq
      %v281 = vshrl.u32 %v280, 7
      %v282 = vsub.s32 0, %v281
      %v283 = vrot.slane %v278, %v282
      %v284 = vlaneseq
      %v285 = vshrl.u32 %v284, 7
      %v286 = vsub.s32 0, %v285
      %v287 = vrot.slane %v279, %v286
      %vm288 = vcmp.eq.s32.totalorder %v283, 1
      %vm289 = vcmp.eq.s32.totalorder %v287, 1
      %v290 = vsel %vm288, %v261, 0.0
      %v291 = vsel %vm289, %v260, 0.0
      %v292 = vld [vmem:[%s1] sm:$0xf]
      %v293 = vpack.c.bf16 %v292, %v292
      %v294 = vpack.c.bf16 %v290, %v290
      %v295 = vpack.c.bf16 %v291, %v291
      %296 = vrot.lane.b32.xlu0 %v247, 16
      %v297 = vpop.permute.xlu0 %296
      %298 = vrot.lane.b32.xlu0 %v253, 16
      %v299 = vpop.permute.xlu0 %298
      %vm300 = vcmp.lt.s32.totalorder %v250, 16
      %v301 = vsel %vm300, %v297, %v299
      %v302 = vsel %vm300, %v299, %v297
      %v303 = vsel %vm262, 1, 0
      %v304 = vsel %vm263, 1, 0
      %vm305 = vcmp.eq.s32.totalorder %v303, 1
      %vm306 = vcmp.eq.s32.totalorder %v304, 1
      %v307 = vsel %vm305, %v302, 0.0
      %v308 = vsel %vm306, %v301, 0.0
      %s309 = scalar_lea.vmem %s1, 4
      %v310 = vld [vmem:[%s309] sm:$0xf]
      %v311 = vpack.c.bf16 %v310, %v310
      %v312 = vpack.c.bf16 %v307, %v307
      %v313 = vpack.c.bf16 %v308, %v308
      %vm314 = vcmask 31744
      %v316 = vsel %vm314, %v311, 0
      %vm318 = vcmask 1041408
      %v320 = vsel %vm318, %v312, 0
      %v323 = vsel %vm318, %v313, 0
      %325 = vmatprep.subr.bf16.mxu0 %v323
      %326 = vmatpush1.bf16.msra.mxu0 %v320
      %327 = vmatprep.subr.bf16.mxu0 0
      %328 = vmatpush1.bf16.msra.mxu0 0
      %329 = vmatprep.subr.bf16.mxu0 0
      %330 = vmatpush1.bf16.msra.mxu0 0
      %331 = vmatprep.subr.bf16.mxu0 0
      %332 = vmatpush1.bf16.msra.mxu0 0
      %333 = vmatprep.subr.bf16.mxu0 0
      %334 = vmatpush1.bf16.msra.mxu0 0
      %335 = vmatprep.subr.bf16.mxu0 0
      %336 = vmatpush1.bf16.msra.mxu0 0
      %337 = vmatprep.subr.bf16.mxu0 0
      %338 = vmatpush1.bf16.msra.mxu0 0
      %339 = vmatprep.subr.bf16.mxu0 0
      %340 = vmatpush1.bf16.msra.mxu0 0
      %341 = vmatprep.subr.bf16.mxu0 0
      %342 = vmatpush1.bf16.msra.mxu0 0
      %343 = vmatprep.subr.bf16.mxu0 0
      %344 = vmatpush1.bf16.msra.mxu0 0
      %345 = vmatprep.subr.bf16.mxu0 0
      %346 = vmatpush1.bf16.msra.mxu0 0
      %347 = vmatprep.subr.bf16.mxu0 0
      %348 = vmatpush1.bf16.msra.mxu0 0
      %349 = vmatprep.subr.bf16.mxu0 0
      %350 = vmatpush1.bf16.msra.mxu0 0
      %351 = vmatprep.subr.bf16.mxu0 0
      %352 = vmatpush1.bf16.msra.mxu0 0
      %353 = vmatprep.subr.bf16.mxu0 0
      %354 = vmatpush1.bf16.msra.mxu0 0
      %355 = vmatprep.subr.bf16.mxu0 0
      %356 = vmatpush1.bf16.msra.mxu0 0
      %357 = vmatprep.mubr.bf16.mxu0 0
      %358 = vmatmul.mubr.bf16.gmra.mrb[0].mxu0 %v316
      %v359 = vpop.f32.mrb[0].mxu0
      %v360 = vadd.f32 0.0, %v359
      %v361 = vpop.f32.mrb[0].mxu0
      %v362 = vadd.f32 0.0, %v361
      %v363 = vpop.f32.mrb[0].mxu0
      %v364 = vpop.f32.mrb[0].mxu0
      %365 = vdwg.mxu0
      %v367 = vsel %vm314, %v293, 0
      %v370 = vsel %vm318, %v294, 0
      %v373 = vsel %vm318, %v295, 0
      %375 = vmatprep.subr.bf16.mxu0 %v373
      %376 = vmatpush1.bf16.msra.mxu0 %v370
      %377 = vmatprep.subr.bf16.mxu0 0
      %378 = vmatpush1.bf16.msra.mxu0 0
      %379 = vmatprep.subr.bf16.mxu0 0
      %380 = vmatpush1.bf16.msra.mxu0 0
      %381 = vmatprep.subr.bf16.mxu0 0
      %382 = vmatpush1.bf16.msra.mxu0 0
      %383 = vmatprep.subr.bf16.mxu0 0
      %384 = vmatpush1.bf16.msra.mxu0 0
      %385 = vmatprep.subr.bf16.mxu0 0
      %386 = vmatpush1.bf16.msra.mxu0 0
      %387 = vmatprep.subr.bf16.mxu0 0
      %388 = vmatpush1.bf16.msra.mxu0 0
      %389 = vmatprep.subr.bf16.mxu0 0
      %390 = vmatpush1.bf16.msra.mxu0 0
      %391 = vmatprep.subr.bf16.mxu0 0
      %392 = vmatpush1.bf16.msra.mxu0 0
      %393 = vmatprep.subr.bf16.mxu0 0
      %394 = vmatpush1.bf16.msra.mxu0 0
      %395 = vmatprep.subr.bf16.mxu0 0
      %396 = vmatpush1.bf16.msra.mxu0 0
      %397 = vmatprep.subr.bf16.mxu0 0
      %398 = vmatpush1.bf16.msra.mxu0 0
      %399 = vmatprep.subr.bf16.mxu0 0
      %400 = vmatpush1.bf16.msra.mxu0 0
      %401 = vmatprep.subr.bf16.mxu0 0
      %402 = vmatpush1.bf16.msra.mxu0 0
      %403 = vmatprep.subr.bf16.mxu0 0
      %404 = vmatpush1.bf16.msra.mxu0 0
      %405 = vmatprep.subr.bf16.mxu0 0
      %406 = vmatpush1.bf16.msra.mxu0 0
      %407 = vmatprep.mubr.bf16.mxu0 0
      %408 = vmatmul.mubr.bf16.gmra.mrb[0].mxu0 %v367
      %v409 = vpop.f32.mrb[0].mxu0
      %v410 = vadd.f32 %v360, %v409
      %v411 = vpop.f32.mrb[0].mxu0
      %v412 = vadd.f32 %v362, %v411
      %v413 = vpop.f32.mrb[0].mxu0
      %v414 = vpop.f32.mrb[0].mxu0
      %415 = vdwg.mxu0
      %416 = vrot.lane.b32.xlu0 %v247, 15
      %v417 = vpop.permute.xlu0 %416
      %418 = vrot.lane.b32.xlu0 %v253, 15
      %v419 = vpop.permute.xlu0 %418
      %vm420 = vcmp.lt.s32.totalorder %v250, 15
      %v421 = vsel %vm420, %v417, %v419
      %v422 = vsel %vm420, %v419, %v417
      %vm423 = vcmp.lt.s32.totalorder %v248, 15
      %v424 = vsel %vm423, 1, 0
      %v425 = vlaneseq
      %v426 = vshrl.u32 %v425, 7
      %v427 = vsub.s32 0, %v426
      %v428 = vrot.slane %v424, %v427
      %v429 = vlaneseq
      %v430 = vshrl.u32 %v429, 7
      %v431 = vsub.s32 1, %v430
      %v432 = vrot.slane %v424, %v431
      %vm433 = vcmp.ne.s32.totalorder %v428, 0
      %vm434 = vcmp.ne.s32.totalorder %v432, 0
      %vm435 = vmand %vm262, %vm433
      %vm436 = vmand %vm263, %vm434
      %v437 = vsel %vm435, 1, 0
      %v438 = vsel %vm436, 1, 0
      %v439 = vlaneseq
      %v440 = vshrl.u32 %v439, 7
      %v441 = vsub.s32 0, %v440
      %v442 = vrot.slane %v437, %v441
      %v443 = vlaneseq
      %v444 = vshrl.u32 %v443, 7
      %v445 = vsub.s32 0, %v444
      %v446 = vrot.slane %v438, %v445
      %vm447 = vcmp.eq.s32.totalorder %v442, 1
      %vm448 = vcmp.eq.s32.totalorder %v446, 1
      %v449 = vsel %vm447, %v422, 0.0
      %v450 = vsel %vm448, %v421, 0.0
      %s451 = scalar_lea.vmem %s1, 8
      %v452 = vld [vmem:[%s451] sm:$0xf]
      %v453 = vpack.c.bf16 %v452, %v452
      %v454 = vpack.c.bf16 %v449, %v449
      %v455 = vpack.c.bf16 %v450, %v450
      %v457 = vsel %vm314, %v453, 0
      %v460 = vsel %vm318, %v454, 0
      %v463 = vsel %vm318, %v455, 0
      %465 = vmatprep.subr.bf16.mxu0 %v463
      %466 = vmatpush1.bf16.msra.mxu0 %v460
      %467 = vmatprep.subr.bf16.mxu0 0
      %468 = vmatpush1.bf16.msra.mxu0 0
      %469 = vmatprep.subr.bf16.mxu0 0
      %470 = vmatpush1.bf16.msra.mxu0 0
      %471 = vmatprep.subr.bf16.mxu0 0
      %472 = vmatpush1.bf16.msra.mxu0 0
      %473 = vmatprep.subr.bf16.mxu0 0
      %474 = vmatpush1.bf16.msra.mxu0 0
      %475 = vmatprep.subr.bf16.mxu0 0
      %476 = vmatpush1.bf16.msra.mxu0 0
      %477 = vmatprep.subr.bf16.mxu0 0
      %478 = vmatpush1.bf16.msra.mxu0 0
      %479 = vmatprep.subr.bf16.mxu0 0
      %480 = vmatpush1.bf16.msra.mxu0 0
      %481 = vmatprep.subr.bf16.mxu0 0
      %482 = vmatpush1.bf16.msra.mxu0 0
      %483 = vmatprep.subr.bf16.mxu0 0
      %484 = vmatpush1.bf16.msra.mxu0 0
      %485 = vmatprep.subr.bf16.mxu0 0
      %486 = vmatpush1.bf16.msra.mxu0 0
      %487 = vmatprep.subr.bf16.mxu0 0
      %488 = vmatpush1.bf16.msra.mxu0 0
      %489 = vmatprep.subr.bf16.mxu0 0
      %490 = vmatpush1.bf16.msra.mxu0 0
      %491 = vmatprep.subr.bf16.mxu0 0
      %492 = vmatpush1.bf16.msra.mxu0 0
      %493 = vmatprep.subr.bf16.mxu0 0
      %494 = vmatpush1.bf16.msra.mxu0 0
      %495 = vmatprep.subr.bf16.mxu0 0
      %496 = vmatpush1.bf16.msra.mxu0 0
      %497 = vmatprep.mubr.bf16.mxu0 0
      %498 = vmatmul.mubr.bf16.gmra.mrb[0].mxu0 %v457
      %v499 = vpop.f32.mrb[0].mxu0
      %v500 = vadd.f32 0.0, %v499
      %v501 = vpop.f32.mrb[0].mxu0
      %v502 = vadd.f32 0.0, %v501
      %v503 = vpop.f32.mrb[0].mxu0
      %v504 = vpop.f32.mrb[0].mxu0
      %505 = vdwg.mxu0
      %v506 = vadd.f32 %v410, %v500
      %v507 = vadd.f32 %v412, %v502
      %508 = vrot.lane.b32.xlu0 %v247, 1
      %v509 = vpop.permute.xlu0 %508
      %510 = vrot.lane.b32.xlu0 %v253, 1
      %v511 = vpop.permute.xlu0 %510
      %vm512 = vcmp.lt.s32.totalorder %v250, 1
      %v513 = vsel %vm512, %v509, %v511
      %v514 = vsel %vm512, %v511, %v509
      %vm515 = vcmp.eq.s32.totalorder %v269, 1
      %vm516 = vcmp.eq.s32.totalorder %v273, 1
      %v517 = vsel %vm515, %v514, 0.0
      %v518 = vsel %vm516, %v513, 0.0
      %s519 = scalar_lea.vmem %s1, 12
      %v520 = vld [vmem:[%s519] sm:$0xf]
      %v521 = vpack.c.bf16 %v520, %v520
      %v522 = vpack.c.bf16 %v517, %v517
      %v523 = vpack.c.bf16 %v518, %v518
      %v525 = vsel %vm314, %v521, 0
      %v528 = vsel %vm318, %v522, 0
      %v531 = vsel %vm318, %v523, 0
      %533 = vmatprep.subr.bf16.mxu0 %v531
      %534 = vmatpush1.bf16.msra.mxu0 %v528
      %535 = vmatprep.subr.bf16.mxu0 0
      %536 = vmatpush1.bf16.msra.mxu0 0
      %537 = vmatprep.subr.bf16.mxu0 0
      %538 = vmatpush1.bf16.msra.mxu0 0
      %539 = vmatprep.subr.bf16.mxu0 0
      %540 = vmatpush1.bf16.msra.mxu0 0
      %541 = vmatprep.subr.bf16.mxu0 0
      %542 = vmatpush1.bf16.msra.mxu0 0
      %543 = vmatprep.subr.bf16.mxu0 0
      %544 = vmatpush1.bf16.msra.mxu0 0
      %545 = vmatprep.subr.bf16.mxu0 0
      %546 = vmatpush1.bf16.msra.mxu0 0
      %547 = vmatprep.subr.bf16.mxu0 0
      %548 = vmatpush1.bf16.msra.mxu0 0
      %549 = vmatprep.subr.bf16.mxu0 0
      %550 = vmatpush1.bf16.msra.mxu0 0
      %551 = vmatprep.subr.bf16.mxu0 0
      %552 = vmatpush1.bf16.msra.mxu0 0
      %553 = vmatprep.subr.bf16.mxu0 0
      %554 = vmatpush1.bf16.msra.mxu0 0
      %555 = vmatprep.subr.bf16.mxu0 0
      %556 = vmatpush1.bf16.msra.mxu0 0
      %557 = vmatprep.subr.bf16.mxu0 0
      %558 = vmatpush1.bf16.msra.mxu0 0
      %559 = vmatprep.subr.bf16.mxu0 0
      %560 = vmatpush1.bf16.msra.mxu0 0
      %561 = vmatprep.subr.bf16.mxu0 0
      %562 = vmatpush1.bf16.msra.mxu0 0
      %563 = vmatprep.subr.bf16.mxu0 0
      %564 = vmatpush1.bf16.msra.mxu0 0
      %565 = vmatprep.mubr.bf16.mxu0 0
      %566 = vmatmul.mubr.bf16.gmra.mrb[0].mxu0 %v525
      %v567 = vpop.f32.mrb[0].mxu0
      %v568 = vadd.f32 0.0, %v567
      %v569 = vpop.f32.mrb[0].mxu0
      %v570 = vadd.f32 0.0, %v569
      %v571 = vpop.f32.mrb[0].mxu0
      %v572 = vpop.f32.mrb[0].mxu0
      %573 = vdwg.mxu0
      %v574 = vadd.f32 %v506, %v568
      %v575 = vadd.f32 %v507, %v570
      %s576 = scalar_lea.vmem %s1, 16
      %v577 = vld [vmem:[%s576] sm:$0xf]
      %v578 = vpack.c.bf16 %v577, %v577
      %v579 = vpack.c.bf16 %v247, %v247
      %v580 = vpack.c.bf16 %v253, %v253
      %v582 = vsel %vm314, %v578, 0
      %v585 = vsel %vm318, %v579, 0
      %v588 = vsel %vm318, %v580, 0
      %590 = vmatprep.subr.bf16.mxu0 %v588
      %591 = vmatpush1.bf16.msra.mxu0 %v585
      %592 = vmatprep.subr.bf16.mxu0 0
      %593 = vmatpush1.bf16.msra.mxu0 0
      %594 = vmatprep.subr.bf16.mxu0 0
      %595 = vmatpush1.bf16.msra.mxu0 0
      %596 = vmatprep.subr.bf16.mxu0 0
      %597 = vmatpush1.bf16.msra.mxu0 0
      %598 = vmatprep.subr.bf16.mxu0 0
      %599 = vmatpush1.bf16.msra.mxu0 0
      %600 = vmatprep.subr.bf16.mxu0 0
      %601 = vmatpush1.bf16.msra.mxu0 0
      %602 = vmatprep.subr.bf16.mxu0 0
      %603 = vmatpush1.bf16.msra.mxu0 0
      %604 = vmatprep.subr.bf16.mxu0 0
      %605 = vmatpush1.bf16.msra.mxu0 0
      %606 = vmatprep.subr.bf16.mxu0 0
      %607 = vmatpush1.bf16.msra.mxu0 0
      %608 = vmatprep.subr.bf16.mxu0 0
      %609 = vmatpush1.bf16.msra.mxu0 0
      %610 = vmatprep.subr.bf16.mxu0 0
      %611 = vmatpush1.bf16.msra.mxu0 0
      %612 = vmatprep.subr.bf16.mxu0 0
      %613 = vmatpush1.bf16.msra.mxu0 0
      %614 = vmatprep.subr.bf16.mxu0 0
      %615 = vmatpush1.bf16.msra.mxu0 0
      %616 = vmatprep.subr.bf16.mxu0 0
      %617 = vmatpush1.bf16.msra.mxu0 0
      %618 = vmatprep.subr.bf16.mxu0 0
      %619 = vmatpush1.bf16.msra.mxu0 0
      %620 = vmatprep.subr.bf16.mxu0 0
      %621 = vmatpush1.bf16.msra.mxu0 0
      %622 = vmatprep.mubr.bf16.mxu0 0
      %623 = vmatmul.mubr.bf16.gmra.mrb[0].mxu0 %v582
      %v624 = vpop.f32.mrb[0].mxu0
      %v625 = vadd.f32 0.0, %v624
      %v626 = vpop.f32.mrb[0].mxu0
      %v627 = vadd.f32 0.0, %v626
      %v628 = vpop.f32.mrb[0].mxu0
      %v629 = vpop.f32.mrb[0].mxu0
      %630 = vdwg.mxu0
      %v631 = vadd.f32 %v574, %v625
      %v632 = vadd.f32 %v575, %v627
      %633 = vrot.lane.b32.xlu0 %v247, 127
      %v634 = vpop.permute.xlu0 %633
      %635 = vrot.lane.b32.xlu0 %v253, 127
      %v636 = vpop.permute.xlu0 %635
      %vm637 = vcmp.lt.s32.totalorder %v250, 127
      %v638 = vsel %vm637, %v634, %v636
      %v639 = vsel %vm637, %v636, %v634
      %vm640 = vcmp.eq.s32.totalorder %v428, 1
      %vm641 = vcmp.eq.s32.totalorder %v432, 1
      %v642 = vsel %vm640, %v638, 0.0
      %v643 = vsel %vm641, %v639, 0.0
      %s644 = scalar_lea.vmem %s1, 20
      %v645 = vld [vmem:[%s644] sm:$0xf]
      %v646 = vpack.c.bf16 %v645, %v645
      %v647 = vpack.c.bf16 %v642, %v642
      %v648 = vpack.c.bf16 %v643, %v643
      %v650 = vsel %vm314, %v646, 0
      %v653 = vsel %vm318, %v647, 0
      %v656 = vsel %vm318, %v648, 0
      %658 = vmatprep.subr.bf16.mxu0 %v656
      %659 = vmatpush1.bf16.msra.mxu0 %v653
      %660 = vmatprep.subr.bf16.mxu0 0
      %661 = vmatpush1.bf16.msra.mxu0 0
      %662 = vmatprep.subr.bf16.mxu0 0
      %663 = vmatpush1.bf16.msra.mxu0 0
      %664 = vmatprep.subr.bf16.mxu0 0
      %665 = vmatpush1.bf16.msra.mxu0 0
      %666 = vmatprep.subr.bf16.mxu0 0
      %667 = vmatpush1.bf16.msra.mxu0 0
      %668 = vmatprep.subr.bf16.mxu0 0
      %669 = vmatpush1.bf16.msra.mxu0 0
      %670 = vmatprep.subr.bf16.mxu0 0
      %671 = vmatpush1.bf16.msra.mxu0 0
      %672 = vmatprep.subr.bf16.mxu0 0
      %673 = vmatpush1.bf16.msra.mxu0 0
      %674 = vmatprep.subr.bf16.mxu0 0
      %675 = vmatpush1.bf16.msra.mxu0 0
      %676 = vmatprep.subr.bf16.mxu0 0
      %677 = vmatpush1.bf16.msra.mxu0 0
      %678 = vmatprep.subr.bf16.mxu0 0
      %679 = vmatpush1.bf16.msra.mxu0 0
      %680 = vmatprep.subr.bf16.mxu0 0
      %681 = vmatpush1.bf16.msra.mxu0 0
      %682 = vmatprep.subr.bf16.mxu0 0
      %683 = vmatpush1.bf16.msra.mxu0 0
      %684 = vmatprep.subr.bf16.mxu0 0
      %685 = vmatpush1.bf16.msra.mxu0 0
      %686 = vmatprep.subr.bf16.mxu0 0
      %687 = vmatpush1.bf16.msra.mxu0 0
      %688 = vmatprep.subr.bf16.mxu0 0
      %689 = vmatpush1.bf16.msra.mxu0 0
      %690 = vmatprep.mubr.bf16.mxu0 0
      %691 = vmatmul.mubr.bf16.gmra.mrb[0].mxu0 %v650
      %v692 = vpop.f32.mrb[0].mxu0
      %v693 = vadd.f32 0.0, %v692
      %v694 = vpop.f32.mrb[0].mxu0
      %v695 = vadd.f32 0.0, %v694
      %v696 = vpop.f32.mrb[0].mxu0
      %v697 = vpop.f32.mrb[0].mxu0
      %698 = vdwg.mxu0
      %v699 = vadd.f32 %v631, %v693
      %v700 = vadd.f32 %v632, %v695
      %701 = vrot.lane.b32.xlu0 %v247, 113
      %v702 = vpop.permute.xlu0 %701
      %703 = vrot.lane.b32.xlu0 %v253, 113
      %v704 = vpop.permute.xlu0 %703
      %vm705 = vcmp.lt.s32.totalorder %v250, 113
      %v706 = vsel %vm705, %v702, %v704
      %v707 = vsel %vm705, %v704, %v702
      %vm708 = vcmp.lt.s32.totalorder %v250, 240
      %vm709 = vcmp.lt.s32.totalorder %v251, 240
      %vm710 = vmand %vm708, %vm274
      %vm711 = vmand %vm709, %vm275
      %v712 = vsel %vm710, 1, 0
      %v713 = vsel %vm711, 1, 0
      %v714 = vlaneseq
      %v715 = vshrl.u32 %v714, 7
      %v716 = vsub.s32 0, %v715
      %v717 = vrot.slane %v712, %v716
      %v718 = vlaneseq
      %v719 = vshrl.u32 %v718, 7
      %v720 = vsub.s32 0, %v719
      %v721 = vrot.slane %v713, %v720
      %vm722 = vcmp.eq.s32.totalorder %v717, 1
      %vm723 = vcmp.eq.s32.totalorder %v721, 1
      %v724 = vsel %vm722, %v706, 0.0
      %v725 = vsel %vm723, %v707, 0.0
      %s726 = scalar_lea.vmem %s1, 24
      %v727 = vld [vmem:[%s726] sm:$0xf]
      %v728 = vpack.c.bf16 %v727, %v727
      %v729 = vpack.c.bf16 %v724, %v724
      %v730 = vpack.c.bf16 %v725, %v725
      %v732 = vsel %vm314, %v728, 0
      %v735 = vsel %vm318, %v729, 0
      %v738 = vsel %vm318, %v730, 0
      %740 = vmatprep.subr.bf16.mxu0 %v738
      %741 = vmatpush1.bf16.msra.mxu0 %v735
      %742 = vmatprep.subr.bf16.mxu0 0
      %743 = vmatpush1.bf16.msra.mxu0 0
      %744 = vmatprep.subr.bf16.mxu0 0
      %745 = vmatpush1.bf16.msra.mxu0 0
      %746 = vmatprep.subr.bf16.mxu0 0
      %747 = vmatpush1.bf16.msra.mxu0 0
      %748 = vmatprep.subr.bf16.mxu0 0
      %749 = vmatpush1.bf16.msra.mxu0 0
      %750 = vmatprep.subr.bf16.mxu0 0
      %751 = vmatpush1.bf16.msra.mxu0 0
      %752 = vmatprep.subr.bf16.mxu0 0
      %753 = vmatpush1.bf16.msra.mxu0 0
      %754 = vmatprep.subr.bf16.mxu0 0
      %755 = vmatpush1.bf16.msra.mxu0 0
      %756 = vmatprep.subr.bf16.mxu0 0
      %757 = vmatpush1.bf16.msra.mxu0 0
      %758 = vmatprep.subr.bf16.mxu0 0
      %759 = vmatpush1.bf16.msra.mxu0 0
      %760 = vmatprep.subr.bf16.mxu0 0
      %761 = vmatpush1.bf16.msra.mxu0 0
      %762 = vmatprep.subr.bf16.mxu0 0
      %763 = vmatpush1.bf16.msra.mxu0 0
      %764 = vmatprep.subr.bf16.mxu0 0
      %765 = vmatpush1.bf16.msra.mxu0 0
      %766 = vmatprep.subr.bf16.mxu0 0
      %767 = vmatpush1.bf16.msra.mxu0 0
      %768 = vmatprep.subr.bf16.mxu0 0
      %769 = vmatpush1.bf16.msra.mxu0 0
      %770 = vmatprep.subr.bf16.mxu0 0
      %771 = vmatpush1.bf16.msra.mxu0 0
      %772 = vmatprep.mubr.bf16.mxu0 0
      %773 = vmatmul.mubr.bf16.gmra.mrb[0].mxu0 %v732
      %v774 = vpop.f32.mrb[0].mxu0
      %v775 = vadd.f32 0.0, %v774
      %v776 = vpop.f32.mrb[0].mxu0
      %v777 = vadd.f32 0.0, %v776
      %v778 = vpop.f32.mrb[0].mxu0
      %v779 = vpop.f32.mrb[0].mxu0
      %780 = vdwg.mxu0
      %v781 = vadd.f32 %v699, %v775
      %v782 = vadd.f32 %v700, %v777
      %783 = vrot.lane.b32.xlu0 %v247, 112
      %v784 = vpop.permute.xlu0 %783
      %785 = vrot.lane.b32.xlu0 %v253, 112
      %v786 = vpop.permute.xlu0 %785
      %vm787 = vcmp.lt.s32.totalorder %v250, 112
      %v788 = vsel %vm787, %v784, %v786
      %v789 = vsel %vm787, %v786, %v784
      %v790 = vsel %vm708, 1, 0
      %v791 = vsel %vm709, 1, 0
      %vm792 = vcmp.eq.s32.totalorder %v790, 1
      %vm793 = vcmp.eq.s32.totalorder %v791, 1
      %v794 = vsel %vm792, %v788, 0.0
      %v795 = vsel %vm793, %v789, 0.0
      %s796 = scalar_lea.vmem %s1, 28
      %v797 = vld [vmem:[%s796] sm:$0xf]
      %v798 = vpack.c.bf16 %v797, %v797
      %v799 = vpack.c.bf16 %v794, %v794
      %v800 = vpack.c.bf16 %v795, %v795
      %v802 = vsel %vm314, %v798, 0
      %v805 = vsel %vm318, %v799, 0
      %v808 = vsel %vm318, %v800, 0
      %810 = vmatprep.subr.bf16.mxu0 %v808
      %811 = vmatpush1.bf16.msra.mxu0 %v805
      %812 = vmatprep.subr.bf16.mxu0 0
      %813 = vmatpush1.bf16.msra.mxu0 0
      %814 = vmatprep.subr.bf16.mxu0 0
      %815 = vmatpush1.bf16.msra.mxu0 0
      %816 = vmatprep.subr.bf16.mxu0 0
      %817 = vmatpush1.bf16.msra.mxu0 0
      %818 = vmatprep.subr.bf16.mxu0 0
      %819 = vmatpush1.bf16.msra.mxu0 0
      %820 = vmatprep.subr.bf16.mxu0 0
      %821 = vmatpush1.bf16.msra.mxu0 0
      %822 = vmatprep.subr.bf16.mxu0 0
      %823 = vmatpush1.bf16.msra.mxu0 0
      %824 = vmatprep.subr.bf16.mxu0 0
      %825 = vmatpush1.bf16.msra.mxu0 0
      %826 = vmatprep.subr.bf16.mxu0 0
      %827 = vmatpush1.bf16.msra.mxu0 0
      %828 = vmatprep.subr.bf16.mxu0 0
      %829 = vmatpush1.bf16.msra.mxu0 0
      %830 = vmatprep.subr.bf16.mxu0 0
      %831 = vmatpush1.bf16.msra.mxu0 0
      %832 = vmatprep.subr.bf16.mxu0 0
      %833 = vmatpush1.bf16.msra.mxu0 0
      %834 = vmatprep.subr.bf16.mxu0 0
      %835 = vmatpush1.bf16.msra.mxu0 0
      %836 = vmatprep.subr.bf16.mxu0 0
      %837 = vmatpush1.bf16.msra.mxu0 0
      %838 = vmatprep.subr.bf16.mxu0 0
      %839 = vmatpush1.bf16.msra.mxu0 0
      %840 = vmatprep.subr.bf16.mxu0 0
      %841 = vmatpush1.bf16.msra.mxu0 0
      %842 = vmatprep.mubr.bf16.mxu0 0
      %843 = vmatmul.mubr.bf16.gmra.mrb[0].mxu0 %v802
      %v844 = vpop.f32.mrb[0].mxu0
      %v845 = vadd.f32 0.0, %v844
      %v846 = vpop.f32.mrb[0].mxu0
      %v847 = vadd.f32 0.0, %v846
      %v848 = vpop.f32.mrb[0].mxu0
      %v849 = vpop.f32.mrb[0].mxu0
      %850 = vdwg.mxu0
      %v851 = vadd.f32 %v781, %v845
      %v852 = vadd.f32 %v782, %v847
      %853 = vrot.lane.b32.xlu0 %v247, 111
      %v854 = vpop.permute.xlu0 %853
      %855 = vrot.lane.b32.xlu0 %v253, 111
      %v856 = vpop.permute.xlu0 %855
      %vm857 = vcmp.lt.s32.totalorder %v250, 111
      %v858 = vsel %vm857, %v854, %v856
      %v859 = vsel %vm857, %v856, %v854
      %vm860 = vmand %vm708, %vm433
      %vm861 = vmand %vm709, %vm434
      %v862 = vsel %vm860, 1, 0
      %v863 = vsel %vm861, 1, 0
      %v864 = vlaneseq
      %v865 = vshrl.u32 %v864, 7
      %v866 = vsub.s32 0, %v865
      %v867 = vrot.slane %v862, %v866
      %v868 = vlaneseq
      %v869 = vshrl.u32 %v868, 7
      %v870 = vsub.s32 0, %v869
      %v871 = vrot.slane %v863, %v870
      %vm872 = vcmp.eq.s32.totalorder %v867, 1
      %vm873 = vcmp.eq.s32.totalorder %v871, 1
      %v874 = vsel %vm872, %v858, 0.0
      %v875 = vsel %vm873, %v859, 0.0
      %s876 = scalar_lea.vmem %s1, 32
      %v877 = vld [vmem:[%s876] sm:$0xf]
      %v878 = vpack.c.bf16 %v877, %v877
      %v879 = vpack.c.bf16 %v874, %v874
      %v880 = vpack.c.bf16 %v875, %v875
      %v882 = vsel %vm314, %v878, 0
      %v885 = vsel %vm318, %v879, 0
      %v888 = vsel %vm318, %v880, 0
      %890 = vmatprep.subr.bf16.mxu0 %v888
      %891 = vmatpush1.bf16.msra.mxu0 %v885
      %892 = vmatprep.subr.bf16.mxu0 0
      %893 = vmatpush1.bf16.msra.mxu0 0
      %894 = vmatprep.subr.bf16.mxu0 0
      %895 = vmatpush1.bf16.msra.mxu0 0
      %896 = vmatprep.subr.bf16.mxu0 0
      %897 = vmatpush1.bf16.msra.mxu0 0
      %898 = vmatprep.subr.bf16.mxu0 0
      %899 = vmatpush1.bf16.msra.mxu0 0
      %900 = vmatprep.subr.bf16.mxu0 0
      %901 = vmatpush1.bf16.msra.mxu0 0
      %902 = vmatprep.subr.bf16.mxu0 0
      %903 = vmatpush1.bf16.msra.mxu0 0
      %904 = vmatprep.subr.bf16.mxu0 0
      %905 = vmatpush1.bf16.msra.mxu0 0
      %906 = vmatprep.subr.bf16.mxu0 0
      %907 = vmatpush1.bf16.msra.mxu0 0
      %908 = vmatprep.subr.bf16.mxu0 0
      %909 = vmatpush1.bf16.msra.mxu0 0
      %910 = vmatprep.subr.bf16.mxu0 0
      %911 = vmatpush1.bf16.msra.mxu0 0
      %912 = vmatprep.subr.bf16.mxu0 0
      %913 = vmatpush1.bf16.msra.mxu0 0
      %914 = vmatprep.subr.bf16.mxu0 0
      %915 = vmatpush1.bf16.msra.mxu0 0
      %916 = vmatprep.subr.bf16.mxu0 0
      %917 = vmatpush1.bf16.msra.mxu0 0
      %918 = vmatprep.subr.bf16.mxu0 0
      %919 = vmatpush1.bf16.msra.mxu0 0
      %920 = vmatprep.subr.bf16.mxu0 0
      %921 = vmatpush1.bf16.msra.mxu0 0
      %922 = vmatprep.mubr.bf16.mxu0 0
      %923 = vmatmul.mubr.bf16.gmra.mrb[0].mxu0 %v882
      %v924 = vpop.f32.mrb[0].mxu0
      %v925 = vadd.f32 0.0, %v924
      %v926 = vpop.f32.mrb[0].mxu0
      %v927 = vadd.f32 0.0, %v926
      %v928 = vpop.f32.mrb[0].mxu0
      %v929 = vpop.f32.mrb[0].mxu0
      %930 = vdwg.mxu0
      %v931 = vadd.f32 %v851, %v925
      %v932 = vadd.f32 %v852, %v927
      %v935 = vcombine.low %v931, %v932
      %937 = vst [vmem:[%s237] sm:$0xff] %v935
      %vm938 = vcmask 1043456
      %v939 = vsel %vm938, %v931, 0.0
      %v940 = vsel %vm938, %v932, 0.0
      %v941 = vadd.f32 %v939, %v940
      %942 = vadd.xlane.f32.xlu0 %v941
      %v943 = vpop.xlane.xlu0 %942
      %vm944 = vcmask 3072
      %945 = vst.msk [vmem:[%s241] sm:$0xf] %vm944, %v943
      %v946 = vmul.f32 %v931, %v931
      %v947 = vmul.f32 %v932, %v932
      %v948 = vsel %vm938, %v946, 0.0
      %v949 = vsel %vm938, %v947, 0.0
      %v950 = vadd.f32 %v948, %v949
      %951 = vadd.xlane.f32.xlu0 %v950
      %v952 = vpop.xlane.xlu0 %951
      %953 = vst.msk [vmem:[%s245] sm:$0xf] %vm944, %v952
      %p954 = scmp.lt.s32.totalorder %s17, 1
      %s955 = scalar_select %p954, %s17, 1
      %s956 = smul.addr %s955, 2
      %s957 = smul.addr %s956, 4
      %s958 = scalar_lea.vmem %s3, %s957
      %p959 = scmp.lt.s32.totalorder %s17, 1
      %s960 = scalar_select %p959, %s17, 1
      %s961 = smul.addr %s960, 4
      %s962 = scalar_lea.vmem %s4, %s961
      %p963 = scmp.lt.s32.totalorder %s17, 1
      %s964 = scalar_select %p963, %s17, 1
      %s965 = smul.addr %s964, 4
      %s966 = scalar_lea.vmem %s5, %s965
      // Predicated region
      $region33: #{residual_block.3} parent=31 // pred_check
        %p967 = pneg %p103
      $region34: #{residual_block.3} parent=31 // pred_check_branch
        %969 = sbr.rel (%p967) target = $region36
      $region35: #{residual_block.3} parent=31 // pred_region
        _
      $region36: #{residual_block.3} parent=31 // pred_fallthru
        _
      // Predicated region
      $region37: #{residual_block.3} parent=31 // pred_check
        %p970 = pneg %p129
      $region38: #{residual_block.3} parent=31 // pred_check_branch
        %972 = sbr.rel (%p970) target = $region40
      $region39: #{residual_block.3} parent=31 // pred_region
        _
      $region40: #{residual_block.3} parent=31 // pred_fallthru
        _
      // Predicated region
      $region41: #{residual_block.3} parent=31 // pred_check
        %p973 = pneg %p155
      $region42: #{residual_block.3} parent=31 // pred_check_branch
        %975 = sbr.rel (%p973) target = $region44
      $region43: #{residual_block.3} parent=31 // pred_region
        _
      $region44: #{residual_block.3} parent=31 // pred_fallthru
        _
    $region32: #{residual_block.3} parent=5 // pred_fallthru
      _
    %p976 = scmp.le.s32.totalorder 2, %s12
    // Predicated region
    $region45: #{residual_block.3} parent=5 // pred_check
      %p977 = pneg %p976
    $region46: #{residual_block.3} parent=5 // pred_check_branch
      %979 = sbr.rel (%p977) target = $region48
    $region47: #{residual_block.3} parent=5 // pred_region
      %s980 = ssub.s32 %s12, 2
      // Predicated region
      $region49: #{residual_block.3} parent=47 // pred_check
        %p981 = pneg %p109
      $region50: #{residual_block.3} parent=47 // pred_check_branch
        %983 = sbr.rel (%p981) target = $region52
      $region51: #{residual_block.3} parent=47 // pred_region
        %p984 = scmp.lt.s32.totalorder %s18, 1
        %s985 = scalar_select %p984, %s18, 1
        %s986 = smul.addr %s985, 2
        %s987 = smul.addr %s986, 4
        %s988 = scalar_lea.vmem %s3, %s987
      $region52: #{residual_block.3} parent=47 // pred_fallthru
        _
      // Predicated region
      $region53: #{residual_block.3} parent=47 // pred_check
        %p989 = pneg %p135
      $region54: #{residual_block.3} parent=47 // pred_check_branch
        %991 = sbr.rel (%p989) target = $region56
      $region55: #{residual_block.3} parent=47 // pred_region
        %p992 = scmp.lt.s32.totalorder %s18, 1
        %s993 = scalar_select %p992, %s18, 1
        %s994 = smul.addr %s993, 4
        %s995 = scalar_lea.vmem %s4, %s994
      $region56: #{residual_block.3} parent=47 // pred_fallthru
        _
      // Predicated region
      $region57: #{residual_block.3} parent=47 // pred_check
        %p996 = pneg %p161
      $region58: #{residual_block.3} parent=47 // pred_check_branch
        %998 = sbr.rel (%p996) target = $region60
      $region59: #{residual_block.3} parent=47 // pred_region
        %p999 = scmp.lt.s32.totalorder %s18, 1
        %s1000 = scalar_select %p999, %s18, 1
        %s1001 = smul.addr %s1000, 4
        %s1002 = scalar_lea.vmem %s5, %s1001
      $region60: #{residual_block.3} parent=47 // pred_fallthru
        _
    $region48: #{residual_block.3} parent=5 // pred_fallthru
      _
  $region6: #{residual_block.3} parent=0 // loop_footer
    %s16 = sadd.s32 1, %s12
  $region7: #{residual_block.3} parent=0 // loop_footer_branch
    %11 = sbr.rel target = $region3
  $region8: #{residual_block.3} parent=0 // loop_exit
    _

// kernel: residual_block.4
$region0: #{residual_block.4}
  #allocation0 [shape = 'u32[]', space=smem, size = 0x4, offset = 0x4, fixed_abs, tag = 'smem constant byte address 0x4 - core index']
  #allocation1 [shape = 'u32[144,128]{1,0:T(1,128)}', space=vmem, size = 0x12000, scoped, tag = 'internal scratch']
  %s0 = inlined_call_operand.vmem [shape: f32[2,4,256], index: 0, kind: input, shape index: {}]
  %s1 = inlined_call_operand.vmem [shape: f32[4,1], index: 1, kind: input, shape index: {}]
  %s2 = inlined_call_operand.vmem [shape: f32[4,1], index: 2, kind: input, shape index: {}]
  %s3 = inlined_call_operand.vmem [shape: f32[9,4,4], index: 3, kind: input, shape index: {}]
  %s4 = inlined_call_operand.vmem [shape: s32[1,256], index: 4, kind: input, shape index: {}]
  %s5 = inlined_call_operand.vmem [shape: f32[2,4,256], index: 5, kind: output, shape index: {0}]
  %s6 = inlined_call_operand.vmem [shape: f32[2,4,1], index: 6, kind: output, shape index: {1}]
  %s7 = inlined_call_operand.vmem [shape: f32[2,4,1], index: 7, kind: output, shape index: {2}]
  %8 = xla_tuple %s5, %s6, %s7
  %s9 = sld [smem:[#allocation0]]
  $region69: #{residual_block.4} parent=0
    _
  %s11 = ssub.s32 1, %s9
  %s12 = scalar_select 0, %s11, %s9
  loop: start=0, step=1, limit=4
  $region2: #{residual_block.4} parent=0 // loop_pre_header
    _
  $region3: #{residual_block.4} parent=0 // loop_header
    %s14 = sphi 0, %s18
    %p15 = scmp.ge.s32.totalorder %s14, 4
    %s24 = sphi 0, %s26
    %s27 = sphi 0, %s24
    %s28 = sphi 0, %s27
    %s44 = sphi 0, %s28
    %s48 = sphi 0, %s48
    %s50 = sphi 0, %s48
    %s51 = sphi 0, %s50
    %s65 = sphi 0, %s51
    %s69 = sphi 0, %s69
    %s71 = sphi 0, %s69
    %s72 = sphi 0, %s71
    %s86 = sphi 0, %s72
    %s90 = sphi 0, %s90
    %s92 = sphi 0, %s90
    %s93 = sphi 0, %s92
    %s107 = sphi 0, %s93
    %s111 = sphi 0, %s111
    %s113 = sphi 0, %s111
    %s114 = sphi 0, %s113
    %s128 = sphi 0, %s114
    %s134 = sphi 0, %s136
    %s137 = sphi 0, %s134
    %s138 = sphi 0, %s137
    %s154 = sphi 0, %s138
    %s160 = sphi 0, %s162
    %s163 = sphi 0, %s160
    %s164 = sphi 0, %s163
    %s180 = sphi 0, %s164
    %s186 = sphi 0, %s188
    %s189 = sphi 0, %s186
    %s190 = sphi 0, %s189
    %s206 = sphi 0, %s190
  $region4: #{residual_block.4} parent=0 // loop_header_branch
    %17 = sbr.rel (%p15) target = $region8
  $region5: #{residual_block.4} parent=0 // loop_body
    %s19 = ssub.s32 %s14, 1
    %s20 = ssub.s32 %s14, 2
    %s21 = sadd.s32 %s14, 1
    %s22 = ssub.s32 %s14, %s21
    %p23 = scmp.eq.s32.totalorder %s22, 0
    %s25 = sadd.s32 %s24, 1
    %s26 = scalar_select %p23, %s24, %s25
    %p29 = pneg %p23
    %p30 = scmp.eq.s32.totalorder %s14, 1
    %p31 = por %p29, %p30
    %p32 = scmp.ne.s32.totalorder %s24, %s27
    %p33 = scmp.eq.s32.totalorder %s14, 0
    %p34 = por %p32, %p33
    %p35 = scmp.ne.s32.totalorder %s24, %s27
    %p36 = scmp.eq.s32.totalorder %s19, 1
    %p37 = por %p35, %p36
    %p38 = scmp.ne.s32.totalorder %s27, %s28
    %p39 = scmp.eq.s32.totalorder %s19, 0
    %p40 = por %p38, %p39
    %p41 = scmp.ne.s32.totalorder %s27, %s28
    %p42 = scmp.eq.s32.totalorder %s20, 1
    %p43 = por %p41, %p42
    %p45 = scmp.ne.s32.totalorder %s28, %s44
    %p46 = scmp.eq.s32.totalorder %s20, 0
    %p47 = por %p45, %p46
    %s49 = sadd.s32 %s48, 1
    %p52 = scmp.eq.s32.totalorder %s14, 1
    %p53 = scmp.ne.s32.totalorder %s48, %s50
    %p54 = scmp.eq.s32.totalorder %s14, 0
    %p55 = por %p53, %p54
    %p56 = scmp.ne.s32.totalorder %s48, %s50
    %p57 = scmp.eq.s32.totalorder %s19, 1
    %p58 = por %p56, %p57
    %p59 = scmp.ne.s32.totalorder %s50, %s51
    %p60 = scmp.eq.s32.totalorder %s19, 0
    %p61 = por %p59, %p60
    %p62 = scmp.ne.s32.totalorder %s50, %s51
    %p63 = scmp.eq.s32.totalorder %s20, 1
    %p64 = por %p62, %p63
    %p66 = scmp.ne.s32.totalorder %s51, %s65
    %p67 = scmp.eq.s32.totalorder %s20, 0
    %p68 = por %p66, %p67
    %s70 = sadd.s32 %s69, 1
    %p73 = scmp.eq.s32.totalorder %s14, 1
    %p74 = scmp.ne.s32.totalorder %s69, %s71
    %p75 = scmp.eq.s32.totalorder %s14, 0
    %p76 = por %p74, %p75
    %p77 = scmp.ne.s32.totalorder %s69, %s71
    %p78 = scmp.eq.s32.totalorder %s19, 1
    %p79 = por %p77, %p78
    %p80 = scmp.ne.s32.totalorder %s71, %s72
    %p81 = scmp.eq.s32.totalorder %s19, 0
    %p82 = por %p80, %p81
    %p83 = scmp.ne.s32.totalorder %s71, %s72
    %p84 = scmp.eq.s32.totalorder %s20, 1
    %p85 = por %p83, %p84
    %p87 = scmp.ne.s32.totalorder %s72, %s86
    %p88 = scmp.eq.s32.totalorder %s20, 0
    %p89 = por %p87, %p88
    %s91 = sadd.s32 %s90, 1
    %p94 = scmp.eq.s32.totalorder %s14, 1
    %p95 = scmp.ne.s32.totalorder %s90, %s92
    %p96 = scmp.eq.s32.totalorder %s14, 0
    %p97 = por %p95, %p96
    %p98 = scmp.ne.s32.totalorder %s90, %s92
    %p99 = scmp.eq.s32.totalorder %s19, 1
    %p100 = por %p98, %p99
    %p101 = scmp.ne.s32.totalorder %s92, %s93
    %p102 = scmp.eq.s32.totalorder %s19, 0
    %p103 = por %p101, %p102
    %p104 = scmp.ne.s32.totalorder %s92, %s93
    %p105 = scmp.eq.s32.totalorder %s20, 1
    %p106 = por %p104, %p105
    %p108 = scmp.ne.s32.totalorder %s93, %s107
    %p109 = scmp.eq.s32.totalorder %s20, 0
    %p110 = por %p108, %p109
    %s112 = sadd.s32 %s111, 1
    %p115 = scmp.eq.s32.totalorder %s14, 1
    %p116 = scmp.ne.s32.totalorder %s111, %s113
    %p117 = scmp.eq.s32.totalorder %s14, 0
    %p118 = por %p116, %p117
    %p119 = scmp.ne.s32.totalorder %s111, %s113
    %p120 = scmp.eq.s32.totalorder %s19, 1
    %p121 = por %p119, %p120
    %p122 = scmp.ne.s32.totalorder %s113, %s114
    %p123 = scmp.eq.s32.totalorder %s19, 0
    %p124 = por %p122, %p123
    %p125 = scmp.ne.s32.totalorder %s113, %s114
    %p126 = scmp.eq.s32.totalorder %s20, 1
    %p127 = por %p125, %p126
    %p129 = scmp.ne.s32.totalorder %s114, %s128
    %p130 = scmp.eq.s32.totalorder %s20, 0
    %p131 = por %p129, %p130
    %s132 = ssub.s32 %s14, %s21
    %p133 = scmp.eq.s32.totalorder %s132, 0
    %s135 = sadd.s32 %s134, 1
    %s136 = scalar_select %p133, %s134, %s135
    %p139 = pneg %p133
    %p140 = scmp.eq.s32.totalorder %s14, 1
    %p141 = por %p139, %p140
    %p142 = scmp.ne.s32.totalorder %s134, %s137
    %p143 = scmp.eq.s32.totalorder %s14, 0
    %p144 = por %p142, %p143
    %p145 = scmp.ne.s32.totalorder %s134, %s137
    %p146 = scmp.eq.s32.totalorder %s19, 1
    %p147 = por %p145, %p146
    %p148 = scmp.ne.s32.totalorder %s137, %s138
    %p149 = scmp.eq.s32.totalorder %s19, 0
    %p150 = por %p148, %p149
    %p151 = scmp.ne.s32.totalorder %s137, %s138
    %p152 = scmp.eq.s32.totalorder %s20, 1
    %p153 = por %p151, %p152
    %p155 = scmp.ne.s32.totalorder %s138, %s154
    %p156 = scmp.eq.s32.totalorder %s20, 0
    %p157 = por %p155, %p156
    %s158 = ssub.s32 %s14, %s21
    %p159 = scmp.eq.s32.totalorder %s158, 0
    %s161 = sadd.s32 %s160, 1
    %s162 = scalar_select %p159, %s160, %s161
    %p165 = pneg %p159
    %p166 = scmp.eq.s32.totalorder %s14, 1
    %p167 = por %p165, %p166
    %p168 = scmp.ne.s32.totalorder %s160, %s163
    %p169 = scmp.eq.s32.totalorder %s14, 0
    %p170 = por %p168, %p169
    %p171 = scmp.ne.s32.totalorder %s160, %s163
    %p172 = scmp.eq.s32.totalorder %s19, 1
    %p173 = por %p171, %p172
    %p174 = scmp.ne.s32.totalorder %s163, %s164
    %p175 = scmp.eq.s32.totalorder %s19, 0
    %p176 = por %p174, %p175
    %p177 = scmp.ne.s32.totalorder %s163, %s164
    %p178 = scmp.eq.s32.totalorder %s20, 1
    %p179 = por %p177, %p178
    %p181 = scmp.ne.s32.totalorder %s164, %s180
    %p182 = scmp.eq.s32.totalorder %s20, 0
    %p183 = por %p181, %p182
    %s184 = ssub.s32 %s14, %s21
    %p185 = scmp.eq.s32.totalorder %s184, 0
    %s187 = sadd.s32 %s186, 1
    %s188 = scalar_select %p185, %s186, %s187
    %p191 = pneg %p185
    %p192 = scmp.eq.s32.totalorder %s14, 1
    %p193 = por %p191, %p192
    %p194 = scmp.ne.s32.totalorder %s186, %s189
    %p195 = scmp.eq.s32.totalorder %s14, 0
    %p196 = por %p194, %p195
    %p197 = scmp.ne.s32.totalorder %s186, %s189
    %p198 = scmp.eq.s32.totalorder %s19, 1
    %p199 = por %p197, %p198
    %p200 = scmp.ne.s32.totalorder %s189, %s190
    %p201 = scmp.eq.s32.totalorder %s19, 0
    %p202 = por %p200, %p201
    %p203 = scmp.ne.s32.totalorder %s189, %s190
    %p204 = scmp.eq.s32.totalorder %s20, 1
    %p205 = por %p203, %p204
    %p207 = scmp.ne.s32.totalorder %s190, %s206
    %p208 = scmp.eq.s32.totalorder %s20, 0
    %p209 = por %p207, %p208
    %p210 = scmp.le.s32.totalorder 1, %s14
    %p211 = scmp.lt.s32.totalorder %s14, 3
    %p212 = pnand %p210, %p211
    %p213 = pneg %p212
    // Predicated region
    $region9: #{residual_block.4} parent=5 // pred_check
      _
    $region10: #{residual_block.4} parent=5 // pred_check_branch
      %215 = sbr.rel (%p212) target = $region12
    $region11: #{residual_block.4} parent=5 // pred_region
      %s216 = ssub.s32 %s14, 1
      // Predicated region
      $region13: #{residual_block.4} parent=11 // pred_check
        %p217 = pneg %p61
      $region14: #{residual_block.4} parent=11 // pred_check_branch
        %219 = sbr.rel (%p217) target = $region16
      $region15: #{residual_block.4} parent=11 // pred_region
        _
      $region16: #{residual_block.4} parent=11 // pred_fallthru
        _
      // Predicated region
      $region17: #{residual_block.4} parent=11 // pred_check
        %p220 = pneg %p82
      $region18: #{residual_block.4} parent=11 // pred_check_branch
        %222 = sbr.rel (%p220) target = $region20
      $region19: #{residual_block.4} parent=11 // pred_region
        _
      $region20: #{residual_block.4} parent=11 // pred_fallthru
        _
      // Predicated region
      $region21: #{residual_block.4} parent=11 // pred_check
        %p223 = pneg %p103
      $region22: #{residual_block.4} parent=11 // pred_check_branch
        %225 = sbr.rel (%p223) target = $region24
      $region23: #{residual_block.4} parent=11 // pred_region
        _
      $region24: #{residual_block.4} parent=11 // pred_fallthru
        _
      // Predicated region
      $region25: #{residual_block.4} parent=11 // pred_check
        %p226 = pneg %p124
      $region26: #{residual_block.4} parent=11 // pred_check_branch
        %228 = sbr.rel (%p226) target = $region28
      $region27: #{residual_block.4} parent=11 // pred_region
        _
      $region28: #{residual_block.4} parent=11 // pred_fallthru
        _
    $region12: #{residual_block.4} parent=5 // pred_fallthru
      _
    %p229 = scmp.lt.s32.totalorder %s14, 2
    // Predicated region
    $region29: #{residual_block.4} parent=5 // pred_check
      %p230 = pneg %p229
    $region30: #{residual_block.4} parent=5 // pred_check_branch
      %232 = sbr.rel (%p230) target = $region32
    $region31: #{residual_block.4} parent=5 // pred_region
      // Predicated region
      $region33: #{residual_block.4} parent=31 // pred_check
        %p233 = pneg %p34
      $region34: #{residual_block.4} parent=31 // pred_check_branch
        %235 = sbr.rel (%p233) target = $region36
      $region35: #{residual_block.4} parent=31 // pred_region
        %p236 = scmp.lt.s32.totalorder %s14, 1
        %s237 = scalar_select %p236, %s14, 1
        %s238 = smul.addr %s237, 2
        %s239 = smul.addr %s238, 4
        %s240 = scalar_lea.vmem %s0, %s239
      $region36: #{residual_block.4} parent=31 // pred_fallthru
        _
    $region32: #{residual_block.4} parent=5 // pred_fallthru
      _
    %p241 = scmp.le.s32.totalorder 1, %s14
    %p242 = scmp.lt.s32.totalorder %s14, 3
    %p243 = pnand %p241, %p242
    %p244 = pneg %p243
    // Predicated region
    $region37: #{residual_block.4} parent=5 // pred_check
      _
    $region38: #{residual_block.4} parent=5 // pred_check_branch
      %246 = sbr.rel (%p243) target = $region40
    $region39: #{residual_block.4} parent=5 // pred_region
      %s247 = ssub.s32 %s14, 1
      %p248 = scmp.lt.s32.totalorder %s19, 1
      %s249 = scalar_select %p248, %s19, 1
      %s250 = smul.addr %s249, 2
      %s251 = smul.addr %s250, 4
      %s252 = scalar_lea.vmem %s0, %s251
      %p253 = pneg %p40
      %p254 = pneg %p37
      %p255 = pneg %p61
      %p256 = pneg %p58
      %p257 = pneg %p82
      %p258 = pneg %p79
      %p259 = pneg %p103
      %p260 = pneg %p100
      %p261 = pneg %p124
      %p262 = pneg %p121
      %p263 = pneg %p150
      %p264 = pneg %p147
      %p265 = scmp.lt.s32.totalorder %s19, 1
      %s266 = scalar_select %p265, %s19, 1
      %s267 = smul.addr %s266, 2
      %s268 = smul.addr %s267, 4
      %s269 = scalar_lea.vmem %s5, %s268
      %p270 = pneg %p176
      %p271 = pneg %p173
      %p272 = scmp.lt.s32.totalorder %s19, 1
      %s273 = scalar_select %p272, %s19, 1
      %s274 = smul.addr %s273, 4
      %s275 = scalar_lea.vmem %s6, %s274
      %p276 = pneg %p202
      %p277 = pneg %p199
      %p278 = scmp.lt.s32.totalorder %s19, 1
      %s279 = scalar_select %p278, %s19, 1
      %s280 = smul.addr %s279, 4
      %s281 = scalar_lea.vmem %s7, %s280
      %p282 = scmp.lt.s32.totalorder %s19, 1
      %s283 = scalar_select %p282, %s19, 1
      %s284 = smul.addr %s283, 2
      %s285 = smul.addr %s284, 4
      %s286 = scalar_lea.vmem %s0, %s285
      %p287 = scmp.lt.s32.totalorder %s19, 1
      %s288 = scalar_select %p287, %s19, 1
      %s289 = smul.addr %s288, 2
      %s290 = smul.addr %s289, 4
      %s291 = scalar_lea.vmem %s5, %s290
      %p292 = scmp.lt.s32.totalorder %s19, 1
      %s293 = scalar_select %p292, %s19, 1
      %s294 = smul.addr %s293, 4
      %s295 = scalar_lea.vmem %s6, %s294
      %p296 = scmp.lt.s32.totalorder %s19, 1
      %s297 = scalar_select %p296, %s19, 1
      %s298 = smul.addr %s297, 4
      %s299 = scalar_lea.vmem %s7, %s298
      %v301 = vld [vmem:[%s286] sm:$0xff]
      %v302 = vld [vmem:[%s1] sm:$0xf]
      %304 = vset.pattern.permute.xlu0 0
      %305 = vperm.xlu0 %304, %v302
      %v306 = vpop.permute.xlu0 %305
      %v308 = vunpack.c.l.s4 839922192
      %v309 = vunpack.c.0.s8 %v308
      %v310 = vlaneseq
      %v311 = vshrl.u32 %v310, 7
      %v312 = vsub.s32 %v309, %v311
      %v313 = vrot.slane %v306, %v312
      %v315 = vmul.f32 %v301, %v313
      %v316 = vld [vmem:[%s2] sm:$0xf]
      %318 = vset.pattern.permute.xlu0 0
      %319 = vperm.xlu0 %318, %v316
      %v320 = vpop.permute.xlu0 %319
      %v322 = vunpack.c.l.s4 839922192
      %v323 = vunpack.c.0.s8 %v322
      %v324 = vlaneseq
      %v325 = vshrl.u32 %v324, 7
      %v326 = vsub.s32 %v323, %v325
      %v327 = vrot.slane %v320, %v326
      %v329 = vadd.f32 %v315, %v327
      %v330 = vmax.f32 %v329, 0.0
      %v331 = vld [vmem:[%s4] sm:$0x3]
      %v332 = vlaneseq
      %v333 = vand.u32 %v332, 127
      %v334 = vadd.s32 %v333, 128
      %v336 = vcombine.high %v330, %v330
      %338 = vrot.lane.b32.xlu0 %v330, 17
      %v339 = vpop.permute.xlu0 %338
      %340 = vrot.lane.b32.xlu0 %v336, 17
      %v341 = vpop.permute.xlu0 %340
      %vm342 = vcmp.lt.s32.totalorder %v333, 17
      %v343 = vsel %vm342, %v339, %v341
      %v344 = vsel %vm342, %v341, %v339
      %vm345 = vcmp.ge.s32.totalorder %v333, 16
      %vm346 = vcmp.ge.s32.totalorder %v334, 16
      %vm347 = vcmp.ge.s32.totalorder %v331, 1
      %v348 = vsel %vm347, 1, 0
      %v349 = vlaneseq
      %v350 = vshrl.u32 %v349, 7
      %v351 = vsub.s32 0, %v350
      %v352 = vrot.slane %v348, %v351
      %v353 = vlaneseq
      %v354 = vshrl.u32 %v353, 7
      %v355 = vsub.s32 1, %v354
      %v356 = vrot.slane %v348, %v355
      %vm357 = vcmp.ne.s32.totalorder %v352, 0
      %vm358 = vcmp.ne.s32.totalorder %v356, 0
      %vm359 = vmand %vm345, %vm357
      %vm360 = vmand %vm346, %vm358
      %v361 = vsel %vm359, 1, 0
      %v362 = vsel %vm360, 1, 0
      %v363 = vlaneseq
      %v364 = vshrl.u32 %v363, 7
      %v365 = vsub.s32 0, %v364
      %v366 = vrot.slane %v361, %v365
      %v367 = vlaneseq
      %v368 = vshrl.u32 %v367, 7
      %v369 = vsub.s32 0, %v368
      %v370 = vrot.slane %v362, %v369
      %vm371 = vcmp.eq.s32.totalorder %v366, 1
      %vm372 = vcmp.eq.s32.totalorder %v370, 1
      %v373 = vsel %vm371, %v344, 0.0
      %v374 = vsel %vm372, %v343, 0.0
      %v375 = vld [vmem:[%s3] sm:$0xf]
      %v376 = vpack.c.bf16 %v375, %v375
      %v377 = vpack.c.bf16 %v373, %v373
      %v378 = vpack.c.bf16 %v374, %v374
      %379 = vrot.lane.b32.xlu0 %v330, 16
      %v380 = vpop.permute.xlu0 %379
      %381 = vrot.lane.b32.xlu0 %v336, 16
      %v382 = vpop.permute.xlu0 %381
      %vm383 = vcmp.lt.s32.totalorder %v333, 16
      %v384 = vsel %vm383, %v380, %v382
      %v385 = vsel %vm383, %v382, %v380
      %v386 = vsel %vm345, 1, 0
      %v387 = vsel %vm346, 1, 0
      %vm388 = vcmp.eq.s32.totalorder %v386, 1
      %vm389 = vcmp.eq.s32.totalorder %v387, 1
      %v390 = vsel %vm388, %v385, 0.0
      %v391 = vsel %vm389, %v384, 0.0
      %s392 = scalar_lea.vmem %s3, 4
      %v393 = vld [vmem:[%s392] sm:$0xf]
      %v394 = vpack.c.bf16 %v393, %v393
      %v395 = vpack.c.bf16 %v390, %v390
      %v396 = vpack.c.bf16 %v391, %v391
      %vm397 = vcmask 31744
      %v399 = vsel %vm397, %v394, 0
      %vm401 = vcmask 1041408
      %v403 = vsel %vm401, %v395, 0
      %v406 = vsel %vm401, %v396, 0
      %408 = vmatprep.subr.bf16.mxu0 %v406
      %409 = vmatpush1.bf16.msra.mxu0 %v403
      %410 = vmatprep.subr.bf16.mxu0 0
      %411 = vmatpush1.bf16.msra.mxu0 0
      %412 = vmatprep.subr.bf16.mxu0 0
      %413 = vmatpush1.bf16.msra.mxu0 0
      %414 = vmatprep.subr.bf16.mxu0 0
      %415 = vmatpush1.bf16.msra.mxu0 0
      %416 = vmatprep.subr.bf16.mxu0 0
      %417 = vmatpush1.bf16.msra.mxu0 0
      %418 = vmatprep.subr.bf16.mxu0 0
      %419 = vmatpush1.bf16.msra.mxu0 0
      %420 = vmatprep.subr.bf16.mxu0 0
      %421 = vmatpush1.bf16.msra.mxu0 0
      %422 = vmatprep.subr.bf16.mxu0 0
      %423 = vmatpush1.bf16.msra.mxu0 0
      %424 = vmatprep.subr.bf16.mxu0 0
      %425 = vmatpush1.bf16.msra.mxu0 0
      %426 = vmatprep.subr.bf16.mxu0 0
      %427 = vmatpush1.bf16.msra.mxu0 0
      %428 = vmatprep.subr.bf16.mxu0 0
      %429 = vmatpush1.bf16.msra.mxu0 0
      %430 = vmatprep.subr.bf16.mxu0 0
      %431 = vmatpush1.bf16.msra.mxu0 0
      %432 = vmatprep.subr.bf16.mxu0 0
      %433 = vmatpush1.bf16.msra.mxu0 0
      %434 = vmatprep.subr.bf16.mxu0 0
      %435 = vmatpush1.bf16.msra.mxu0 0
      %436 = vmatprep.subr.bf16.mxu0 0
      %437 = vmatpush1.bf16.msra.mxu0 0
      %438 = vmatprep.subr.bf16.mxu0 0
      %439 = vmatpush1.bf16.msra.mxu0 0
      %440 = vmatprep.mubr.bf16.mxu0 0
      %441 = vmatmul.mubr.bf16.gmra.mrb[0].mxu0 %v399
      %v442 = vpop.f32.mrb[0].mxu0
      %v443 = vadd.f32 0.0, %v442
      %v444 = vpop.f32.mrb[0].mxu0
      %v445 = vadd.f32 0.0, %v444
      %v446 = vpop.f32.mrb[0].mxu0
      %v447 = vpop.f32.mrb[0].mxu0
      %448 = vdwg.mxu0
      %v450 = vsel %vm397, %v376, 0
      %v453 = vsel %vm401, %v377, 0
      %v456 = vsel %vm401, %v378, 0
      %458 = vmatprep.subr.bf16.mxu0 %v456
      %459 = vmatpush1.bf16.msra.mxu0 %v453
      %460 = vmatprep.subr.bf16.mxu0 0
      %461 = vmatpush1.bf16.msra.mxu0 0
      %462 = vmatprep.subr.bf16.mxu0 0
      %463 = vmatpush1.bf16.msra.mxu0 0
      %464 = vmatprep.subr.bf16.mxu0 0
      %465 = vmatpush1.bf16.msra.mxu0 0
      %466 = vmatprep.subr.bf16.mxu0 0
      %467 = vmatpush1.bf16.msra.mxu0 0
      %468 = vmatprep.subr.bf16.mxu0 0
      %469 = vmatpush1.bf16.msra.mxu0 0
      %470 = vmatprep.subr.bf16.mxu0 0
      %471 = vmatpush1.bf16.msra.mxu0 0
      %472 = vmatprep.subr.bf16.mxu0 0
      %473 = vmatpush1.bf16.msra.mxu0 0
      %474 = vmatprep.subr.bf16.mxu0 0
      %475 = vmatpush1.bf16.msra.mxu0 0
      %476 = vmatprep.subr.bf16.mxu0 0
      %477 = vmatpush1.bf16.msra.mxu0 0
      %478 = vmatprep.subr.bf16.mxu0 0
      %479 = vmatpush1.bf16.msra.mxu0 0
      %480 = vmatprep.subr.bf16.mxu0 0
      %481 = vmatpush1.bf16.msra.mxu0 0
      %482 = vmatprep.subr.bf16.mxu0 0
      %483 = vmatpush1.bf16.msra.mxu0 0
      %484 = vmatprep.subr.bf16.mxu0 0
      %485 = vmatpush1.bf16.msra.mxu0 0
      %486 = vmatprep.subr.bf16.mxu0 0
      %487 = vmatpush1.bf16.msra.mxu0 0
      %488 = vmatprep.subr.bf16.mxu0 0
      %489 = vmatpush1.bf16.msra.mxu0 0
      %490 = vmatprep.mubr.bf16.mxu0 0
      %491 = vmatmul.mubr.bf16.gmra.mrb[0].mxu0 %v450
      %v492 = vpop.f32.mrb[0].mxu0
      %v493 = vadd.f32 %v443, %v492
      %v494 = vpop.f32.mrb[0].mxu0
      %v495 = vadd.f32 %v445, %v494
      %v496 = vpop.f32.mrb[0].mxu0
      %v497 = vpop.f32.mrb[0].mxu0
      %498 = vdwg.mxu0
      %499 = vrot.lane.b32.xlu0 %v330, 15
      %v500 = vpop.permute.xlu0 %499
      %501 = vrot.lane.b32.xlu0 %v336, 15
      %v502 = vpop.permute.xlu0 %501
      %vm503 = vcmp.lt.s32.totalorder %v333, 15
      %v504 = vsel %vm503, %v500, %v502
      %v505 = vsel %vm503, %v502, %v500
      %vm506 = vcmp.lt.s32.totalorder %v331, 15
      %v507 = vsel %vm506, 1, 0
      %v508 = vlaneseq
      %v509 = vshrl.u32 %v508, 7
      %v510 = vsub.s32 0, %v509
      %v511 = vrot.slane %v507, %v510
      %v512 = vlaneseq
      %v513 = vshrl.u32 %v512, 7
      %v514 = vsub.s32 1, %v513
      %v515 = vrot.slane %v507, %v514
      %vm516 = vcmp.ne.s32.totalorder %v511, 0
      %vm517 = vcmp.ne.s32.totalorder %v515, 0
      %vm518 = vmand %vm345, %vm516
      %vm519 = vmand %vm346, %vm517
      %v520 = vsel %vm518, 1, 0
      %v521 = vsel %vm519, 1, 0
      %v522 = vlaneseq
      %v523 = vshrl.u32 %v522, 7
      %v524 = vsub.s32 0, %v523
      %v525 = vrot.slane %v520, %v524
      %v526 = vlaneseq
      %v527 = vshrl.u32 %v526, 7
      %v528 = vsub.s32 0, %v527
      %v529 = vrot.slane %v521, %v528
      %vm530 = vcmp.eq.s32.totalorder %v525, 1
      %vm531 = vcmp.eq.s32.totalorder %v529, 1
      %v532 = vsel %vm530, %v505, 0.0
      %v533 = vsel %vm531, %v504, 0.0
      %s534 = scalar_lea.vmem %s3, 8
      %v535 = vld [vmem:[%s534] sm:$0xf]
      %v536 = vpack.c.bf16 %v535, %v535
      %v537 = vpack.c.bf16 %v532, %v532
      %v538 = vpack.c.bf16 %v533, %v533
      %v540 = vsel %vm397, %v536, 0
      %v543 = vsel %vm401, %v537, 0
      %v546 = vsel %vm401, %v538, 0
      %548 = vmatprep.subr.bf16.mxu0 %v546
      %549 = vmatpush1.bf16.msra.mxu0 %v543
      %550 = vmatprep.subr.bf16.mxu0 0
      %551 = vmatpush1.bf16.msra.mxu0 0
      %552 = vmatprep.subr.bf16.mxu0 0
      %553 = vmatpush1.bf16.msra.mxu0 0
      %554 = vmatprep.subr.bf16.mxu0 0
      %555 = vmatpush1.bf16.msra.mxu0 0
      %556 = vmatprep.subr.bf16.mxu0 0
      %557 = vmatpush1.bf16.msra.mxu0 0
      %558 = vmatprep.subr.bf16.mxu0 0
      %559 = vmatpush1.bf16.msra.mxu0 0
      %560 = vmatprep.subr.bf16.mxu0 0
      %561 = vmatpush1.bf16.msra.mxu0 0
      %562 = vmatprep.subr.bf16.mxu0 0
      %563 = vmatpush1.bf16.msra.mxu0 0
      %564 = vmatprep.subr.bf16.mxu0 0
      %565 = vmatpush1.bf16.msra.mxu0 0
      %566 = vmatprep.subr.bf16.mxu0 0
      %567 = vmatpush1.bf16.msra.mxu0 0
      %568 = vmatprep.subr.bf16.mxu0 0
      %569 = vmatpush1.bf16.msra.mxu0 0
      %570 = vmatprep.subr.bf16.mxu0 0
      %571 = vmatpush1.bf16.msra.mxu0 0
      %572 = vmatprep.subr.bf16.mxu0 0
      %573 = vmatpush1.bf16.msra.mxu0 0
      %574 = vmatprep.subr.bf16.mxu0 0
      %575 = vmatpush1.bf16.msra.mxu0 0
      %576 = vmatprep.subr.bf16.mxu0 0
      %577 = vmatpush1.bf16.msra.mxu0 0
      %578 = vmatprep.subr.bf16.mxu0 0
      %579 = vmatpush1.bf16.msra.mxu0 0
      %580 = vmatprep.mubr.bf16.mxu0 0
      %581 = vmatmul.mubr.bf16.gmra.mrb[0].mxu0 %v540
      %v582 = vpop.f32.mrb[0].mxu0
      %v583 = vadd.f32 0.0, %v582
      %v584 = vpop.f32.mrb[0].mxu0
      %v585 = vadd.f32 0.0, %v584
      %v586 = vpop.f32.mrb[0].mxu0
      %v587 = vpop.f32.mrb[0].mxu0
      %588 = vdwg.mxu0
      %v589 = vadd.f32 %v493, %v583
      %v590 = vadd.f32 %v495, %v585
      %591 = vrot.lane.b32.xlu0 %v330, 1
      %v592 = vpop.permute.xlu0 %591
      %593 = vrot.lane.b32.xlu0 %v336, 1
      %v594 = vpop.permute.xlu0 %593
      %vm595 = vcmp.lt.s32.totalorder %v333, 1
      %v596 = vsel %vm595, %v592, %v594
      %v597 = vsel %vm595, %v594, %v592
      %vm598 = vcmp.eq.s32.totalorder %v352, 1
      %vm599 = vcmp.eq.s32.totalorder %v356, 1
      %v600 = vsel %vm598, %v597, 0.0
      %v601 = vsel %vm599, %v596, 0.0
      %s602 = scalar_lea.vmem %s3, 12
      %v603 = vld [vmem:[%s602] sm:$0xf]
      %v604 = vpack.c.bf16 %v603, %v603
      %v605 = vpack.c.bf16 %v600, %v600
      %v606 = vpack.c.bf16 %v601, %v601
      %v608 = vsel %vm397, %v604, 0
      %v611 = vsel %vm401, %v605, 0
      %v614 = vsel %vm401, %v606, 0
      %616 = vmatprep.subr.bf16.mxu0 %v614
      %617 = vmatpush1.bf16.msra.mxu0 %v611
      %618 = vmatprep.subr.bf16.mxu0 0
      %619 = vmatpush1.bf16.msra.mxu0 0
      %620 = vmatprep.subr.bf16.mxu0 0
      %621 = vmatpush1.bf16.msra.mxu0 0
      %622 = vmatprep.subr.bf16.mxu0 0
      %623 = vmatpush1.bf16.msra.mxu0 0
      %624 = vmatprep.subr.bf16.mxu0 0
      %625 = vmatpush1.bf16.msra.mxu0 0
      %626 = vmatprep.subr.bf16.mxu0 0
      %627 = vmatpush1.bf16.msra.mxu0 0
      %628 = vmatprep.subr.bf16.mxu0 0
      %629 = vmatpush1.bf16.msra.mxu0 0
      %630 = vmatprep.subr.bf16.mxu0 0
      %631 = vmatpush1.bf16.msra.mxu0 0
      %632 = vmatprep.subr.bf16.mxu0 0
      %633 = vmatpush1.bf16.msra.mxu0 0
      %634 = vmatprep.subr.bf16.mxu0 0
      %635 = vmatpush1.bf16.msra.mxu0 0
      %636 = vmatprep.subr.bf16.mxu0 0
      %637 = vmatpush1.bf16.msra.mxu0 0
      %638 = vmatprep.subr.bf16.mxu0 0
      %639 = vmatpush1.bf16.msra.mxu0 0
      %640 = vmatprep.subr.bf16.mxu0 0
      %641 = vmatpush1.bf16.msra.mxu0 0
      %642 = vmatprep.subr.bf16.mxu0 0
      %643 = vmatpush1.bf16.msra.mxu0 0
      %644 = vmatprep.subr.bf16.mxu0 0
      %645 = vmatpush1.bf16.msra.mxu0 0
      %646 = vmatprep.subr.bf16.mxu0 0
      %647 = vmatpush1.bf16.msra.mxu0 0
      %648 = vmatprep.mubr.bf16.mxu0 0
      %649 = vmatmul.mubr.bf16.gmra.mrb[0].mxu0 %v608
      %v650 = vpop.f32.mrb[0].mxu0
      %v651 = vadd.f32 0.0, %v650
      %v652 = vpop.f32.mrb[0].mxu0
      %v653 = vadd.f32 0.0, %v652
      %v654 = vpop.f32.mrb[0].mxu0
      %v655 = vpop.f32.mrb[0].mxu0
      %656 = vdwg.mxu0
      %v657 = vadd.f32 %v589, %v651
      %v658 = vadd.f32 %v590, %v653
      %s659 = scalar_lea.vmem %s3, 16
      %v660 = vld [vmem:[%s659] sm:$0xf]
      %v661 = vpack.c.bf16 %v660, %v660
      %v662 = vpack.c.bf16 %v330, %v330
      %v663 = vpack.c.bf16 %v336, %v336
      %v665 = vsel %vm397, %v661, 0
      %v668 = vsel %vm401, %v662, 0
      %v671 = vsel %vm401, %v663, 0
      %673 = vmatprep.subr.bf16.mxu0 %v671
      %674 = vmatpush1.bf16.msra.mxu0 %v668
      %675 = vmatprep.subr.bf16.mxu0 0
      %676 = vmatpush1.bf16.msra.mxu0 0
      %677 = vmatprep.subr.bf16.mxu0 0
      %678 = vmatpush1.bf16.msra.mxu0 0
      %679 = vmatprep.subr.bf16.mxu0 0
      %680 = vmatpush1.bf16.msra.mxu0 0
      %681 = vmatprep.subr.bf16.mxu0 0
      %682 = vmatpush1.bf16.msra.mxu0 0
      %683 = vmatprep.subr.bf16.mxu0 0
      %684 = vmatpush1.bf16.msra.mxu0 0
      %685 = vmatprep.subr.bf16.mxu0 0
      %686 = vmatpush1.bf16.msra.mxu0 0
      %687 = vmatprep.subr.bf16.mxu0 0
      %688 = vmatpush1.bf16.msra.mxu0 0
      %689 = vmatprep.subr.bf16.mxu0 0
      %690 = vmatpush1.bf16.msra.mxu0 0
      %691 = vmatprep.subr.bf16.mxu0 0
      %692 = vmatpush1.bf16.msra.mxu0 0
      %693 = vmatprep.subr.bf16.mxu0 0
      %694 = vmatpush1.bf16.msra.mxu0 0
      %695 = vmatprep.subr.bf16.mxu0 0
      %696 = vmatpush1.bf16.msra.mxu0 0
      %697 = vmatprep.subr.bf16.mxu0 0
      %698 = vmatpush1.bf16.msra.mxu0 0
      %699 = vmatprep.subr.bf16.mxu0 0
      %700 = vmatpush1.bf16.msra.mxu0 0
      %701 = vmatprep.subr.bf16.mxu0 0
      %702 = vmatpush1.bf16.msra.mxu0 0
      %703 = vmatprep.subr.bf16.mxu0 0
      %704 = vmatpush1.bf16.msra.mxu0 0
      %705 = vmatprep.mubr.bf16.mxu0 0
      %706 = vmatmul.mubr.bf16.gmra.mrb[0].mxu0 %v665
      %v707 = vpop.f32.mrb[0].mxu0
      %v708 = vadd.f32 0.0, %v707
      %v709 = vpop.f32.mrb[0].mxu0
      %v710 = vadd.f32 0.0, %v709
      %v711 = vpop.f32.mrb[0].mxu0
      %v712 = vpop.f32.mrb[0].mxu0
      %713 = vdwg.mxu0
      %v714 = vadd.f32 %v657, %v708
      %v715 = vadd.f32 %v658, %v710
      %716 = vrot.lane.b32.xlu0 %v330, 127
      %v717 = vpop.permute.xlu0 %716
      %718 = vrot.lane.b32.xlu0 %v336, 127
      %v719 = vpop.permute.xlu0 %718
      %vm720 = vcmp.lt.s32.totalorder %v333, 127
      %v721 = vsel %vm720, %v717, %v719
      %v722 = vsel %vm720, %v719, %v717
      %vm723 = vcmp.eq.s32.totalorder %v511, 1
      %vm724 = vcmp.eq.s32.totalorder %v515, 1
      %v725 = vsel %vm723, %v721, 0.0
      %v726 = vsel %vm724, %v722, 0.0
      %s727 = scalar_lea.vmem %s3, 20
      %v728 = vld [vmem:[%s727] sm:$0xf]
      %v729 = vpack.c.bf16 %v728, %v728
      %v730 = vpack.c.bf16 %v725, %v725
      %v731 = vpack.c.bf16 %v726, %v726
      %v733 = vsel %vm397, %v729, 0
      %v736 = vsel %vm401, %v730, 0
      %v739 = vsel %vm401, %v731, 0
      %741 = vmatprep.subr.bf16.mxu0 %v739
      %742 = vmatpush1.bf16.msra.mxu0 %v736
      %743 = vmatprep.subr.bf16.mxu0 0
      %744 = vmatpush1.bf16.msra.mxu0 0
      %745 = vmatprep.subr.bf16.mxu0 0
      %746 = vmatpush1.bf16.msra.mxu0 0
      %747 = vmatprep.subr.bf16.mxu0 0
      %748 = vmatpush1.bf16.msra.mxu0 0
      %749 = vmatprep.subr.bf16.mxu0 0
      %750 = vmatpush1.bf16.msra.mxu0 0
      %751 = vmatprep.subr.bf16.mxu0 0
      %752 = vmatpush1.bf16.msra.mxu0 0
      %753 = vmatprep.subr.bf16.mxu0 0
      %754 = vmatpush1.bf16.msra.mxu0 0
      %755 = vmatprep.subr.bf16.mxu0 0
      %756 = vmatpush1.bf16.msra.mxu0 0
      %757 = vmatprep.subr.bf16.mxu0 0
      %758 = vmatpush1.bf16.msra.mxu0 0
      %759 = vmatprep.subr.bf16.mxu0 0
      %760 = vmatpush1.bf16.msra.mxu0 0
      %761 = vmatprep.subr.bf16.mxu0 0
      %762 = vmatpush1.bf16.msra.mxu0 0
      %763 = vmatprep.subr.bf16.mxu0 0
      %764 = vmatpush1.bf16.msra.mxu0 0
      %765 = vmatprep.subr.bf16.mxu0 0
      %766 = vmatpush1.bf16.msra.mxu0 0
      %767 = vmatprep.subr.bf16.mxu0 0
      %768 = vmatpush1.bf16.msra.mxu0 0
      %769 = vmatprep.subr.bf16.mxu0 0
      %770 = vmatpush1.bf16.msra.mxu0 0
      %771 = vmatprep.subr.bf16.mxu0 0
      %772 = vmatpush1.bf16.msra.mxu0 0
      %773 = vmatprep.mubr.bf16.mxu0 0
      %774 = vmatmul.mubr.bf16.gmra.mrb[0].mxu0 %v733
      %v775 = vpop.f32.mrb[0].mxu0
      %v776 = vadd.f32 0.0, %v775
      %v777 = vpop.f32.mrb[0].mxu0
      %v778 = vadd.f32 0.0, %v777
      %v779 = vpop.f32.mrb[0].mxu0
      %v780 = vpop.f32.mrb[0].mxu0
      %781 = vdwg.mxu0
      %v782 = vadd.f32 %v714, %v776
      %v783 = vadd.f32 %v715, %v778
      %784 = vrot.lane.b32.xlu0 %v330, 113
      %v785 = vpop.permute.xlu0 %784
      %786 = vrot.lane.b32.xlu0 %v336, 113
      %v787 = vpop.permute.xlu0 %786
      %vm788 = vcmp.lt.s32.totalorder %v333, 113
      %v789 = vsel %vm788, %v785, %v787
      %v790 = vsel %vm788, %v787, %v785
      %vm791 = vcmp.lt.s32.totalorder %v333, 240
      %vm792 = vcmp.lt.s32.totalorder %v334, 240
      %vm793 = vmand %vm791, %vm357
      %vm794 = vmand %vm792, %vm358
      %v795 = vsel %vm793, 1, 0
      %v796 = vsel %vm794, 1, 0
      %v797 = vlaneseq
      %v798 = vshrl.u32 %v797, 7
      %v799 = vsub.s32 0, %v798
      %v800 = vrot.slane %v795, %v799
      %v801 = vlaneseq
      %v802 = vshrl.u32 %v801, 7
      %v803 = vsub.s32 0, %v802
      %v804 = vrot.slane %v796, %v803
      %vm805 = vcmp.eq.s32.totalorder %v800, 1
      %vm806 = vcmp.eq.s32.totalorder %v804, 1
      %v807 = vsel %vm805, %v789, 0.0
      %v808 = vsel %vm806, %v790, 0.0
      %s809 = scalar_lea.vmem %s3, 24
      %v810 = vld [vmem:[%s809] sm:$0xf]
      %v811 = vpack.c.bf16 %v810, %v810
      %v812 = vpack.c.bf16 %v807, %v807
      %v813 = vpack.c.bf16 %v808, %v808
      %v815 = vsel %vm397, %v811, 0
      %v818 = vsel %vm401, %v812, 0
      %v821 = vsel %vm401, %v813, 0
      %823 = vmatprep.subr.bf16.mxu0 %v821
      %824 = vmatpush1.bf16.msra.mxu0 %v818
      %825 = vmatprep.subr.bf16.mxu0 0
      %826 = vmatpush1.bf16.msra.mxu0 0
      %827 = vmatprep.subr.bf16.mxu0 0
      %828 = vmatpush1.bf16.msra.mxu0 0
      %829 = vmatprep.subr.bf16.mxu0 0
      %830 = vmatpush1.bf16.msra.mxu0 0
      %831 = vmatprep.subr.bf16.mxu0 0
      %832 = vmatpush1.bf16.msra.mxu0 0
      %833 = vmatprep.subr.bf16.mxu0 0
      %834 = vmatpush1.bf16.msra.mxu0 0
      %835 = vmatprep.subr.bf16.mxu0 0
      %836 = vmatpush1.bf16.msra.mxu0 0
      %837 = vmatprep.subr.bf16.mxu0 0
      %838 = vmatpush1.bf16.msra.mxu0 0
      %839 = vmatprep.subr.bf16.mxu0 0
      %840 = vmatpush1.bf16.msra.mxu0 0
      %841 = vmatprep.subr.bf16.mxu0 0
      %842 = vmatpush1.bf16.msra.mxu0 0
      %843 = vmatprep.subr.bf16.mxu0 0
      %844 = vmatpush1.bf16.msra.mxu0 0
      %845 = vmatprep.subr.bf16.mxu0 0
      %846 = vmatpush1.bf16.msra.mxu0 0
      %847 = vmatprep.subr.bf16.mxu0 0
      %848 = vmatpush1.bf16.msra.mxu0 0
      %849 = vmatprep.subr.bf16.mxu0 0
      %850 = vmatpush1.bf16.msra.mxu0 0
      %851 = vmatprep.subr.bf16.mxu0 0
      %852 = vmatpush1.bf16.msra.mxu0 0
      %853 = vmatprep.subr.bf16.mxu0 0
      %854 = vmatpush1.bf16.msra.mxu0 0
      %855 = vmatprep.mubr.bf16.mxu0 0
      %856 = vmatmul.mubr.bf16.gmra.mrb[0].mxu0 %v815
      %v857 = vpop.f32.mrb[0].mxu0
      %v858 = vadd.f32 0.0, %v857
      %v859 = vpop.f32.mrb[0].mxu0
      %v860 = vadd.f32 0.0, %v859
      %v861 = vpop.f32.mrb[0].mxu0
      %v862 = vpop.f32.mrb[0].mxu0
      %863 = vdwg.mxu0
      %v864 = vadd.f32 %v782, %v858
      %v865 = vadd.f32 %v783, %v860
      %866 = vrot.lane.b32.xlu0 %v330, 112
      %v867 = vpop.permute.xlu0 %866
      %868 = vrot.lane.b32.xlu0 %v336, 112
      %v869 = vpop.permute.xlu0 %868
      %vm870 = vcmp.lt.s32.totalorder %v333, 112
      %v871 = vsel %vm870, %v867, %v869
      %v872 = vsel %vm870, %v869, %v867
      %v873 = vsel %vm791, 1, 0
      %v874 = vsel %vm792, 1, 0
      %vm875 = vcmp.eq.s32.totalorder %v873, 1
      %vm876 = vcmp.eq.s32.totalorder %v874, 1
      %v877 = vsel %vm875, %v871, 0.0
      %v878 = vsel %vm876, %v872, 0.0
      %s879 = scalar_lea.vmem %s3, 28
      %v880 = vld [vmem:[%s879] sm:$0xf]
      %v881 = vpack.c.bf16 %v880, %v880
      %v882 = vpack.c.bf16 %v877, %v877
      %v883 = vpack.c.bf16 %v878, %v878
      %v885 = vsel %vm397, %v881, 0
      %v888 = vsel %vm401, %v882, 0
      %v891 = vsel %vm401, %v883, 0
      %893 = vmatprep.subr.bf16.mxu0 %v891
      %894 = vmatpush1.bf16.msra.mxu0 %v888
      %895 = vmatprep.subr.bf16.mxu0 0
      %896 = vmatpush1.bf16.msra.mxu0 0
      %897 = vmatprep.subr.bf16.mxu0 0
      %898 = vmatpush1.bf16.msra.mxu0 0
      %899 = vmatprep.subr.bf16.mxu0 0
      %900 = vmatpush1.bf16.msra.mxu0 0
      %901 = vmatprep.subr.bf16.mxu0 0
      %902 = vmatpush1.bf16.msra.mxu0 0
      %903 = vmatprep.subr.bf16.mxu0 0
      %904 = vmatpush1.bf16.msra.mxu0 0
      %905 = vmatprep.subr.bf16.mxu0 0
      %906 = vmatpush1.bf16.msra.mxu0 0
      %907 = vmatprep.subr.bf16.mxu0 0
      %908 = vmatpush1.bf16.msra.mxu0 0
      %909 = vmatprep.subr.bf16.mxu0 0
      %910 = vmatpush1.bf16.msra.mxu0 0
      %911 = vmatprep.subr.bf16.mxu0 0
      %912 = vmatpush1.bf16.msra.mxu0 0
      %913 = vmatprep.subr.bf16.mxu0 0
      %914 = vmatpush1.bf16.msra.mxu0 0
      %915 = vmatprep.subr.bf16.mxu0 0
      %916 = vmatpush1.bf16.msra.mxu0 0
      %917 = vmatprep.subr.bf16.mxu0 0
      %918 = vmatpush1.bf16.msra.mxu0 0
      %919 = vmatprep.subr.bf16.mxu0 0
      %920 = vmatpush1.bf16.msra.mxu0 0
      %921 = vmatprep.subr.bf16.mxu0 0
      %922 = vmatpush1.bf16.msra.mxu0 0
      %923 = vmatprep.subr.bf16.mxu0 0
      %924 = vmatpush1.bf16.msra.mxu0 0
      %925 = vmatprep.mubr.bf16.mxu0 0
      %926 = vmatmul.mubr.bf16.gmra.mrb[0].mxu0 %v885
      %v927 = vpop.f32.mrb[0].mxu0
      %v928 = vadd.f32 0.0, %v927
      %v929 = vpop.f32.mrb[0].mxu0
      %v930 = vadd.f32 0.0, %v929
      %v931 = vpop.f32.mrb[0].mxu0
      %v932 = vpop.f32.mrb[0].mxu0
      %933 = vdwg.mxu0
      %v934 = vadd.f32 %v864, %v928
      %v935 = vadd.f32 %v865, %v930
      %936 = vrot.lane.b32.xlu0 %v330, 111
      %v937 = vpop.permute.xlu0 %936
      %938 = vrot.lane.b32.xlu0 %v336, 111
      %v939 = vpop.permute.xlu0 %938
      %vm940 = vcmp.lt.s32.totalorder %v333, 111
      %v941 = vsel %vm940, %v937, %v939
      %v942 = vsel %vm940, %v939, %v937
      %vm943 = vmand %vm791, %vm516
      %vm944 = vmand %vm792, %vm517
      %v945 = vsel %vm943, 1, 0
      %v946 = vsel %vm944, 1, 0
      %v947 = vlaneseq
      %v948 = vshrl.u32 %v947, 7
      %v949 = vsub.s32 0, %v948
      %v950 = vrot.slane %v945, %v949
      %v951 = vlaneseq
      %v952 = vshrl.u32 %v951, 7
      %v953 = vsub.s32 0, %v952
      %v954 = vrot.slane %v946, %v953
      %vm955 = vcmp.eq.s32.totalorder %v950, 1
      %vm956 = vcmp.eq.s32.totalorder %v954, 1
      %v957 = vsel %vm955, %v941, 0.0
      %v958 = vsel %vm956, %v942, 0.0
      %s959 = scalar_lea.vmem %s3, 32
      %v960 = vld [vmem:[%s959] sm:$0xf]
      %v961 = vpack.c.bf16 %v960, %v960
      %v962 = vpack.c.bf16 %v957, %v957
      %v963 = vpack.c.bf16 %v958, %v958
      %v965 = vsel %vm397, %v961, 0
      %v968 = vsel %vm401, %v962, 0
      %v971 = vsel %vm401, %v963, 0
      %973 = vmatprep.subr.bf16.mxu0 %v971
      %974 = vmatpush1.bf16.msra.mxu0 %v968
      %975 = vmatprep.subr.bf16.mxu0 0
      %976 = vmatpush1.bf16.msra.mxu0 0
      %977 = vmatprep.subr.bf16.mxu0 0
      %978 = vmatpush1.bf16.msra.mxu0 0
      %979 = vmatprep.subr.bf16.mxu0 0
      %980 = vmatpush1.bf16.msra.mxu0 0
      %981 = vmatprep.subr.bf16.mxu0 0
      %982 = vmatpush1.bf16.msra.mxu0 0
      %983 = vmatprep.subr.bf16.mxu0 0
      %984 = vmatpush1.bf16.msra.mxu0 0
      %985 = vmatprep.subr.bf16.mxu0 0
      %986 = vmatpush1.bf16.msra.mxu0 0
      %987 = vmatprep.subr.bf16.mxu0 0
      %988 = vmatpush1.bf16.msra.mxu0 0
      %989 = vmatprep.subr.bf16.mxu0 0
      %990 = vmatpush1.bf16.msra.mxu0 0
      %991 = vmatprep.subr.bf16.mxu0 0
      %992 = vmatpush1.bf16.msra.mxu0 0
      %993 = vmatprep.subr.bf16.mxu0 0
      %994 = vmatpush1.bf16.msra.mxu0 0
      %995 = vmatprep.subr.bf16.mxu0 0
      %996 = vmatpush1.bf16.msra.mxu0 0
      %997 = vmatprep.subr.bf16.mxu0 0
      %998 = vmatpush1.bf16.msra.mxu0 0
      %999 = vmatprep.subr.bf16.mxu0 0
      %1000 = vmatpush1.bf16.msra.mxu0 0
      %1001 = vmatprep.subr.bf16.mxu0 0
      %1002 = vmatpush1.bf16.msra.mxu0 0
      %1003 = vmatprep.subr.bf16.mxu0 0
      %1004 = vmatpush1.bf16.msra.mxu0 0
      %1005 = vmatprep.mubr.bf16.mxu0 0
      %1006 = vmatmul.mubr.bf16.gmra.mrb[0].mxu0 %v965
      %v1007 = vpop.f32.mrb[0].mxu0
      %v1008 = vadd.f32 0.0, %v1007
      %v1009 = vpop.f32.mrb[0].mxu0
      %v1010 = vadd.f32 0.0, %v1009
      %v1011 = vpop.f32.mrb[0].mxu0
      %v1012 = vpop.f32.mrb[0].mxu0
      %1013 = vdwg.mxu0
      %v1014 = vadd.f32 %v934, %v1008
      %v1015 = vadd.f32 %v935, %v1010
      %v1018 = vcombine.low %v1014, %v1015
      %1020 = vst [vmem:[%s291] sm:$0xff] %v1018
      %vm1021 = vcmask 1043456
      %v1022 = vsel %vm1021, %v1014, 0.0
      %v1023 = vsel %vm1021, %v1015, 0.0
      %v1024 = vadd.f32 %v1022, %v1023
      %1025 = vadd.xlane.f32.xlu0 %v1024
      %v1026 = vpop.xlane.xlu0 %1025
      %vm1027 = vcmask 3072
      %1028 = vst.msk [vmem:[%s295] sm:$0xf] %vm1027, %v1026
      %v1029 = vmul.f32 %v1014, %v1014
      %v1030 = vmul.f32 %v1015, %v1015
      %v1031 = vsel %vm1021, %v1029, 0.0
      %v1032 = vsel %vm1021, %v1030, 0.0
      %v1033 = vadd.f32 %v1031, %v1032
      %1034 = vadd.xlane.f32.xlu0 %v1033
      %v1035 = vpop.xlane.xlu0 %1034
      %1036 = vst.msk [vmem:[%s299] sm:$0xf] %vm1027, %v1035
      %p1037 = scmp.lt.s32.totalorder %s19, 1
      %s1038 = scalar_select %p1037, %s19, 1
      %s1039 = smul.addr %s1038, 2
      %s1040 = smul.addr %s1039, 4
      %s1041 = scalar_lea.vmem %s5, %s1040
      %p1042 = scmp.lt.s32.totalorder %s19, 1
      %s1043 = scalar_select %p1042, %s19, 1
      %s1044 = smul.addr %s1043, 4
      %s1045 = scalar_lea.vmem %s6, %s1044
      %p1046 = scmp.lt.s32.totalorder %s19, 1
      %s1047 = scalar_select %p1046, %s19, 1
      %s1048 = smul.addr %s1047, 4
      %s1049 = scalar_lea.vmem %s7, %s1048
      // Predicated region
      $region41: #{residual_block.4} parent=39 // pred_check
        %p1050 = pneg %p147
      $region42: #{residual_block.4} parent=39 // pred_check_branch
        %1052 = sbr.rel (%p1050) target = $region44
      $region43: #{residual_block.4} parent=39 // pred_region
        _
      $region44: #{residual_block.4} parent=39 // pred_fallthru
        _
      // Predicated region
      $region45: #{residual_block.4} parent=39 // pred_check
        %p1053 = pneg %p173
      $region46: #{residual_block.4} parent=39 // pred_check_branch
        %1055 = sbr.rel (%p1053) target = $region48
      $region47: #{residual_block.4} parent=39 // pred_region
        _
      $region48: #{residual_block.4} parent=39 // pred_fallthru
        _
      // Predicated region
      $region49: #{residual_block.4} parent=39 // pred_check
        %p1056 = pneg %p199
      $region50: #{residual_block.4} parent=39 // pred_check_branch
        %1058 = sbr.rel (%p1056) target = $region52
      $region51: #{residual_block.4} parent=39 // pred_region
        _
      $region52: #{residual_block.4} parent=39 // pred_fallthru
        _
    $region40: #{residual_block.4} parent=5 // pred_fallthru
      _
    %p1059 = scmp.le.s32.totalorder 2, %s14
    // Predicated region
    $region53: #{residual_block.4} parent=5 // pred_check
      %p1060 = pneg %p1059
    $region54: #{residual_block.4} parent=5 // pred_check_branch
      %1062 = sbr.rel (%p1060) target = $region56
    $region55: #{residual_block.4} parent=5 // pred_region
      %s1063 = ssub.s32 %s14, 2
      // Predicated region
      $region57: #{residual_block.4} parent=55 // pred_check
        %p1064 = pneg %p153
      $region58: #{residual_block.4} parent=55 // pred_check_branch
        %1066 = sbr.rel (%p1064) target = $region60
      $region59: #{residual_block.4} parent=55 // pred_region
        %p1067 = scmp.lt.s32.totalorder %s20, 1
        %s1068 = scalar_select %p1067, %s20, 1
        %s1069 = smul.addr %s1068, 2
        %s1070 = smul.addr %s1069, 4
        %s1071 = scalar_lea.vmem %s5, %s1070
      $region60: #{residual_block.4} parent=55 // pred_fallthru
        _
      // Predicated region
      $region61: #{residual_block.4} parent=55 // pred_check
        %p1072 = pneg %p179
      $region62: #{residual_block.4} parent=55 // pred_check_branch
        %1074 = sbr.rel (%p1072) target = $region64
      $region63: #{residual_block.4} parent=55 // pred_region
        %p1075 = scmp.lt.s32.totalorder %s20, 1
        %s1076 = scalar_select %p1075, %s20, 1
        %s1077 = smul.addr %s1076, 4
        %s1078 = scalar_lea.vmem %s6, %s1077
      $region64: #{residual_block.4} parent=55 // pred_fallthru
        _
      // Predicated region
      $region65: #{residual_block.4} parent=55 // pred_check
        %p1079 = pneg %p205
      $region66: #{residual_block.4} parent=55 // pred_check_branch
        %1081 = sbr.rel (%p1079) target = $region68
      $region67: #{residual_block.4} parent=55 // pred_region
        %p1082 = scmp.lt.s32.totalorder %s20, 1
        %s1083 = scalar_select %p1082, %s20, 1
        %s1084 = smul.addr %s1083, 4
        %s1085 = scalar_lea.vmem %s7, %s1084
      $region68: #{residual_block.4} parent=55 // pred_fallthru
        _
    $region56: #{residual_block.4} parent=5 // pred_fallthru
      _
  $region6: #{residual_block.4} parent=0 // loop_footer
    %s18 = sadd.s32 1, %s14
  $region7: #{residual_block.4} parent=0 // loop_footer_branch
    %13 = sbr.rel target = $region3
  $region8: #{residual_block.4} parent=0 // loop_exit
    _

</llo_original>
